<compile_context>
chip_gen: v7x
topology: tpu7x:2x2x1
jax: 0.10.0
libtpu: 0.0.40
codegen_flags: <defaults>
</compile_context>

<pallas_src>
import functools
import math

import jax
import jax.numpy as jnp
from jax import lax
from jax.experimental import pallas as pl
from jax.experimental.pallas import tpu as pltpu


def _round_up(x, m):
    return ((x + m - 1) // m) * m


# ---------------------------------------------------------------------------
# Kernel 1: row-wise L2 normalization + 1/sqrt(T) fold + bf16 cast.
# ---------------------------------------------------------------------------
def _normalize_kernel(p_ref, q_ref, *, scale):
    p = p_ref[...].astype(jnp.float32)
    ss = jnp.sum(p * p, axis=1, keepdims=True)
    # 1 / max(||p||, 1e-8)  ==  rsqrt(max(||p||^2, 1e-16));  rsqrt -> EUP slot.
    # (PyTorch's F.cosine_similarity clamps the *product* of norms; identical
    #  unless a projection row is ~zero.)
    inv = lax.rsqrt(jnp.maximum(ss, 1e-16)) * scale
    q_ref[...] = (p * inv).astype(q_ref.dtype)


# ---------------------------------------------------------------------------
# Kernel 2: tiled supervised-contrastive loss.
# grid = (row_tiles, phase, col_tiles) -- column (reduction) axis last.
#   phase 0: compute e = exp(s - 1/T) + 1e-5 per block, cache it in VMEM, and
#            accumulate the per-row sum over different-class (valid) columns.
#   phase 1: re-read the cached e blocks, accumulate the masked log-prob sum
#            and the per-row positive-pair count.  No matmul / exp recompute.
# ---------------------------------------------------------------------------
def _spc_tiled_kernel(qa_ref, qb_ref, ta_ref, tb_ref,
                      loss_ref, cnt_ref,
                      e_cache, neg_acc, loss_acc, cnt_acc,
                      *, inv_temp, tm, tn, n_valid, approx_recip):
    # All grid queries at the top level: program_id inside a pl.when body has
    # no lowering rule on the interpret/CPU path (previous compile failure).
    i = pl.program_id(0)
    phase = pl.program_id(1)
    c = pl.program_id(2)
    last_c = pl.num_programs(2) - 1

    ta = ta_ref[...]                                   # (tm, 1)  int32
    tb = tb_ref[...]                                   # (1, tn)  int32
    same = ta == tb                                    # (tm, tn) bool

    rows = i * tm + lax.broadcasted_iota(jnp.int32, (tm, 1), 0)   # (tm, 1)
    cols = c * tn + lax.broadcasted_iota(jnp.int32, (1, tn), 1)   # (1, tn)
    row_ok = rows < n_valid                            # non-padded row
    col_ok = cols < n_valid                            # non-padded column

    @pl.when(jnp.logical_and(phase == 0, c == 0))
    def _init():
        neg_acc[...] = jnp.zeros_like(neg_acc)
        loss_acc[...] = jnp.zeros_like(loss_acc)
        cnt_acc[...] = jnp.zeros_like(cnt_acc)

    @pl.when(phase == 0)
    def _phase0():
        # (TM, TN) block of cos_sim / T: both operands were pre-scaled by
        # 1/sqrt(T).  dot_general contracts the last dims (no XLU transpose);
        # bf16 operands, f32 accumulation on the MXU.
        s = lax.dot_general(
            qa_ref[...], qb_ref[...],
            dimension_numbers=(((1,), (1,)), ((), ())),
            preferred_element_type=jnp.float32)
        # Row max of cos_sim/T is analytically 1/T (self-similarity of
        # L2-normalized rows) -> no (N,N) max reduction needed.
        e = jnp.exp(s - inv_temp) + 1e-5
        e_cache[c] = e                                 # cache for phase 1
        drop = jnp.logical_or(same, jnp.logical_not(col_ok))
        neg_acc[...] += jnp.sum(jnp.where(drop, 0.0, e), axis=1, keepdims=True)

    @pl.when(phase == 1)
    def _phase1():
        e = e_cache[c]                                 # no matmul / exp redo
        pos = jnp.logical_and(jnp.logical_and(same, rows != cols),
                              jnp.logical_and(row_ok, col_ok))
        denom = neg_acc[...] + e + 1e-5                # (TM, TN) row-broadcast
        if approx_recip:
            inv_e = pl.reciprocal(e, approx=True)      # EUP vrcp, saves a log
        else:
            inv_e = 1.0 / e                            # interpret / CPU path
        log_prob = jnp.log(denom * inv_e)              # == -log(e / denom)
        loss_acc[...] += jnp.sum(jnp.where(pos, log_prob, 0.0),
                                 axis=1, keepdims=True)
        cnt_acc[...] += jnp.sum(jnp.where(pos, 1.0, 0.0),
                                axis=1, keepdims=True)

    @pl.when(jnp.logical_and(phase == 1, c == last_c))
    def _finalize():
        loss_ref[...] = loss_acc[...]
        cnt_ref[...] = cnt_acc[...]


def supervised_contrastive_loss(projections, targets, temperature=0.1, *,
                                tm=128, tn=256):
    """projections: (N, D) float; targets: (N,) int class labels."""
    # TODO(synk): the optional `attribute` same-attribute mask of the PyTorch
    # forward (attribute != None branch) is not implemented; this covers the
    # default attribute=None path.
    n, d = projections.shape
    lcm = tm * tn // math.gcd(tm, tn)
    n_pad = _round_up(n, lcm)
    d_pad = _round_up(d, 128)          # lane-align the feature dim for the MXU
    r_rows = n_pad // tm
    r_cols = n_pad // tn

    p = jnp.pad(projections.astype(jnp.float32),
                ((0, n_pad - n), (0, d_pad - d)))
    t = jnp.pad(targets.astype(jnp.int32), (0, n_pad - n))

    # --- 1) normalize rows, fold 1/sqrt(T), cast to bf16 --------------------
    # Purely HBM-bound: use large row tiles (n_pad is always a multiple of 256).
    norm_tile = 512 if n_pad % 512 == 0 else (256 if n_pad % 256 == 0 else 128)
    norm_tile = min(norm_tile, n_pad)
    q = pl.pallas_call(
        functools.partial(_normalize_kernel,
                          scale=1.0 / math.sqrt(temperature)),
        out_shape=jax.ShapeDtypeStruct((n_pad, d_pad), jnp.bfloat16),
        grid_spec=pltpu.PrefetchScalarGridSpec(
            num_scalar_prefetch=0,
            grid=(n_pad // norm_tile,),
            in_specs=[pl.BlockSpec((norm_tile, d_pad), lambda i: (i, 0))],
            out_specs=pl.BlockSpec((norm_tile, d_pad), lambda i: (i, 0)),
        ),
        compiler_params=pltpu.CompilerParams(
            dimension_semantics=("parallel",)),
    )(p)

    # --- 2) tiled loss kernel ------------------------------------------------
    # VMEM budget: e-cache (row-tile x n_pad f32) + double-buffered q blocks.
    # TODO(synk): for very large N on v7x (64 MiB VMEM) cache `s` in bf16 and
    #             re-exp in phase 1 instead of caching f32 `e`.
    e_cache_bytes = r_cols * tm * tn * 4
    vmem_limit = int(min(64 * 1024 * 1024,
                         max(32 * 1024 * 1024,
                             e_cache_bytes + 4 * (tm + tn) * d_pad
                             + 4 * 1024 * 1024)))

    approx_recip = jax.default_backend() == "tpu"

    loss_rows, cnt_rows = pl.pallas_call(
        functools.partial(_spc_tiled_kernel, inv_temp=1.0 / temperature,
                          tm=tm, tn=tn, n_valid=n, approx_recip=approx_recip),
        out_shape=(jax.ShapeDtypeStruct((n_pad, 1), jnp.float32),   # loss/row
                   jax.ShapeDtypeStruct((n_pad, 1), jnp.float32)),  # #pos/row
        grid_spec=pltpu.PrefetchScalarGridSpec(
            num_scalar_prefetch=0,
            grid=(r_rows, 2, r_cols),
            in_specs=[
                # anchors: constant per row tile -> fetched once per row tile
                pl.BlockSpec((tm, d_pad), lambda i, ph, c: (i, 0)),
                # others: block c in phase 0, pinned to block 0 in phase 1 so
                # the cached-e phase does not re-fetch q from HBM
                pl.BlockSpec((tn, d_pad), lambda i, ph, c: (c * (1 - ph), 0)),
                pl.BlockSpec((tm, 1), lambda i, ph, c: (i, 0)),   # labels col
                pl.BlockSpec((1, tn), lambda i, ph, c: (0, c)),   # labels row
            ],
            out_specs=(pl.BlockSpec((tm, 1), lambda i, ph, c: (i, 0)),
                       pl.BlockSpec((tm, 1), lambda i, ph, c: (i, 0))),
            scratch_shapes=[pltpu.VMEM((r_cols, tm, tn), jnp.float32),  # e cache
                            pltpu.VMEM((tm, 1), jnp.float32),   # neg_acc
                            pltpu.VMEM((tm, 1), jnp.float32),   # loss_acc
                            pltpu.VMEM((tm, 1), jnp.float32)],  # cnt_acc
        ),
        compiler_params=pltpu.CompilerParams(
            dimension_semantics=("parallel", "arbitrary", "arbitrary"),
            vmem_limit_bytes=vmem_limit),
    )(q, q, t.reshape(n_pad, 1), t.reshape(1, n_pad))

    # Cardinality comes out of the kernel (per-row positive-pair counts), so
    # no O(N^2) wrapper-side pass is needed.
    return jnp.sum(loss_rows) / (jnp.sum(cnt_rows) + 1e-5)


# ---------------------------------------------------------------------------
# References for testing.
# ---------------------------------------------------------------------------
def _strict_reference(projections, targets, temperature=0.1):
    """Plain-JAX f32 replica of the PyTorch forward (attribute=None path)."""
    p = projections.astype(jnp.float32)
    norms = jnp.sqrt(jnp.sum(p * p, axis=1))
    sim = (p @ p.T) / jnp.maximum(norms[:, None] * norms[None, :], 1e-8)
    sim = sim / temperature
    exp_dot = jnp.exp(sim - jnp.max(sim, axis=1, keepdims=True)) + 1e-5
    same = targets[:, None] == targets[None, :]
    eye = jnp.eye(p.shape[0], dtype=bool)
    combined = jnp.where(same & ~eye, 1.0, 0.0)
    nonsim = jnp.where(same, 0.0, 1.0)
    denom = jnp.sum(exp_dot * nonsim, axis=1, keepdims=True) + exp_dot + 1e-5
    log_prob = -jnp.log(exp_dot / denom)
    return jnp.sum(log_prob * combined) / (jnp.sum(combined) + 1e-5)


def _matched_reference(projections, targets, temperature=0.1):
    """Plain-JAX replica of the kernel's numerics (bf16 matmul operands,
    analytic row max = 1/T, log(denom) - log(e) form)."""
    p = projections.astype(jnp.float32)
    ss = jnp.sum(p * p, axis=1, keepdims=True)
    inv = lax.rsqrt(jnp.maximum(ss, 1e-16)) * (1.0 / math.sqrt(temperature))
    q = (p * inv).astype(jnp.bfloat16)
    s = lax.dot_general(q, q, dimension_numbers=(((1,), (1,)), ((), ())),
                        preferred_element_type=jnp.float32)
    e = jnp.exp(s - 1.0 / temperature) + 1e-5
    same = targets[:, None] == targets[None, :]
    neg = jnp.sum(jnp.where(same, 0.0, e), axis=1, keepdims=True)
    denom = neg + e + 1e-5
    log_prob = jnp.log(denom) - jnp.log(e)
    n = p.shape[0]
    pos = same & ~jnp.eye(n, dtype=bool)
    card = jnp.sum(pos.astype(jnp.float32))
    return jnp.sum(jnp.where(pos, log_prob, 0.0)) / (card + 1e-5)


if __name__ == "__main__":
    key = jax.random.PRNGKey(0)
    k1, k2, k3, k4 = jax.random.split(key, 4)

    loss_fn = jax.jit(functools.partial(supervised_contrastive_loss,
                                        temperature=0.1))

    # Small single-column-tile case: N=48 (padded to 256), D=32 (padded to 128).
    n1, d1 = 48, 32
    proj1 = jax.random.normal(k1, (n1, d1), dtype=jnp.float32)
    tgt1 = jax.random.randint(k2, (n1,), 0, 4, dtype=jnp.int32)
    loss1 = jax.block_until_ready(loss_fn(proj1, tgt1))
    ref1_m = _matched_reference(proj1, tgt1, 0.1)
    ref1_s = _strict_reference(proj1, tgt1, 0.1)
    assert bool(jnp.isfinite(loss1)), loss1
    assert jnp.allclose(loss1, ref1_m, rtol=5e-3, atol=2e-3), (loss1, ref1_m)
    assert jnp.allclose(loss1, ref1_s, rtol=5e-2, atol=5e-2), (loss1, ref1_s)

    # Multi-tile case: N=300 (padded to 512 -> 4 row tiles x 2 col tiles), D=96.
    n2, d2 = 300, 96
    proj2 = jax.random.normal(k3, (n2, d2), dtype=jnp.float32)
    tgt2 = jax.random.randint(k4, (n2,), 0, 5, dtype=jnp.int32)
    loss2 = jax.block_until_ready(loss_fn(proj2, tgt2))
    ref2_m = _matched_reference(proj2, tgt2, 0.1)
    ref2_s = _strict_reference(proj2, tgt2, 0.1)
    assert bool(jnp.isfinite(loss2)), loss2
    assert jnp.allclose(loss2, ref2_m, rtol=5e-3, atol=2e-3), (loss2, ref2_m)
    assert jnp.allclose(loss2, ref2_s, rtol=5e-2, atol=5e-2), (loss2, ref2_s)

    print("KERNEL_OK")
</pallas_src>

<mosaic_0001>
module attributes {stable_mosaic.version = 11 : i64} {
  func.func @_normalize_kernel(%arg0: i32, %arg1: memref<256x128xf32, #tpu.memory_space<vmem>>, %arg2: memref<256x128xbf16, #tpu.memory_space<vmem>>) attributes {dimension_semantics = [#tpu.dimension_semantics<parallel>], iteration_bounds = array<i64: 1>, scalar_prefetch = 0 : i64, scratch_operands = 0 : i64, tpu.core_type = #tpu.core_type<tc>, window_params = [{transform_indices = @transform_0, window_bounds = array<i64: 256, 128>}, {transform_indices = @transform_1, window_bounds = array<i64: 256, 128>}]} {
    %c0 = arith.constant 0 : index
    %c0_0 = arith.constant 0 : index
    %0 = vector.load %arg1[%c0, %c0_0] : memref<256x128xf32, #tpu.memory_space<vmem>>, vector<256x128xf32>
    %1 = arith.mulf %0, %0 : vector<256x128xf32>
    %cst = arith.constant dense<0.000000e+00> : vector<256xf32>
    %2 = vector.multi_reduction <add>, %1, %cst [1] : vector<256x128xf32> to vector<256xf32>
    %3 = vector.shape_cast %2 : vector<256xf32> to vector<256x1xf32>
    %cst_1 = arith.constant 1.000000e-16 : f32
    %4 = vector.broadcast %cst_1 : f32 to vector<256x1xf32>
    %5 = arith.maximumf %3, %4 : vector<256x1xf32>
    %6 = math.rsqrt %5 : vector<256x1xf32>
    %cst_2 = arith.constant 3.1622777 : f32
    %7 = vector.broadcast %cst_2 : f32 to vector<256x1xf32>
    %8 = arith.mulf %6, %7 : vector<256x1xf32>
    %9 = vector.broadcast %8 : vector<256x1xf32> to vector<256x128xf32>
    %10 = arith.mulf %0, %9 : vector<256x128xf32>
    %11 = arith.truncf %10 : vector<256x128xf32> to vector<256x128xbf16>
    %c0_3 = arith.constant 0 : index
    %c0_4 = arith.constant 0 : index
    %12 = vector.load %arg2[%c0_3, %c0_4] : memref<256x128xbf16, #tpu.memory_space<vmem>>, vector<256x128xbf16>
    tpu.vector_store %arg2[%c0_3, %c0_4], %11 {strides = array<i32>} : memref<256x128xbf16, #tpu.memory_space<vmem>>, vector<256x128xbf16>,
    return
  }
  func.func @transform_0(%arg0: i32) -> (i32, i32) {
    %c0_i32 = arith.constant 0 : i32
    %c0_i32_0 = arith.constant 0 : i32
    return %arg0, %c0_i32 : i32, i32
  }
  func.func @transform_1(%arg0: i32) -> (i32, i32) {
    %c0_i32 = arith.constant 0 : i32
    %c0_i32_0 = arith.constant 0 : i32
    return %arg0, %c0_i32 : i32, i32
  }
}

module attributes {stable_mosaic.version = 11 : i64} {
  func.func @_spc_tiled_kernel(%arg0: i32, %arg1: i32, %arg2: i32, %arg3: memref<128x128xbf16, #tpu.memory_space<vmem>>, %arg4: memref<256x128xbf16, #tpu.memory_space<vmem>>, %arg5: memref<128x1xi32, #tpu.memory_space<vmem>>, %arg6: memref<1x256xi32, #tpu.memory_space<vmem>>, %arg7: memref<128x1xf32, #tpu.memory_space<vmem>>, %arg8: memref<128x1xf32, #tpu.memory_space<vmem>>, %arg9: memref<1x128x256xf32, #tpu.memory_space<vmem>>, %arg10: memref<128x1xf32, #tpu.memory_space<vmem>>, %arg11: memref<128x1xf32, #tpu.memory_space<vmem>>, %arg12: memref<128x1xf32, #tpu.memory_space<vmem>>) attributes {dimension_semantics = [#tpu.dimension_semantics<parallel>, #tpu.dimension_semantics<arbitrary>, #tpu.dimension_semantics<arbitrary>], iteration_bounds = array<i64: 2, 2, 1>, scalar_prefetch = 0 : i64, scratch_operands = 4 : i64, tpu.core_type = #tpu.core_type<tc>, window_params = [{transform_indices = @transform_0, window_bounds = array<i64: 128, 128>}, {transform_indices = @transform_1, window_bounds = array<i64: 256, 128>}, {transform_indices = @transform_2, window_bounds = array<i64: 128, 1>}, {transform_indices = @transform_3, window_bounds = array<i64: 1, 256>}, {transform_indices = @transform_4, window_bounds = array<i64: 128, 1>}, {transform_indices = @transform_5, window_bounds = array<i64: 128, 1>}]} {
    %c0 = arith.constant 0 : index
    %c0_0 = arith.constant 0 : index
    %0 = vector.load %arg5[%c0, %c0_0] : memref<128x1xi32, #tpu.memory_space<vmem>>, vector<128x1xi32>
    %c0_1 = arith.constant 0 : index
    %c0_2 = arith.constant 0 : index
    %1 = vector.load %arg6[%c0_1, %c0_2] : memref<1x256xi32, #tpu.memory_space<vmem>>, vector<1x256xi32>
    %2 = vector.broadcast %0 : vector<128x1xi32> to vector<128x256xi32>
    %3 = vector.broadcast %1 : vector<1x256xi32> to vector<128x256xi32>
    %4 = arith.cmpi eq, %2, %3 : vector<128x256xi32>
    %c128_i32 = arith.constant 128 : i32
    %5 = arith.muli %arg0, %c128_i32 : i32
    %6 = tpu.iota {dimensions = array<i32: 0>} : vector<128x1xi32>
    %7 = vector.broadcast %5 : i32 to vector<128x1xi32>
    %8 = arith.addi %7, %6 : vector<128x1xi32>
    %c256_i32 = arith.constant 256 : i32
    %9 = arith.muli %arg2, %c256_i32 : i32
    %10 = tpu.iota {dimensions = array<i32: 1>} : vector<1x256xi32>
    %11 = vector.broadcast %9 : i32 to vector<1x256xi32>
    %12 = arith.addi %11, %10 : vector<1x256xi32>
    %c48_i32 = arith.constant 48 : i32
    %13 = vector.broadcast %c48_i32 : i32 to vector<128x1xi32>
    %14 = arith.cmpi slt, %8, %13 : vector<128x1xi32>
    %c48_i32_3 = arith.constant 48 : i32
    %15 = vector.broadcast %c48_i32_3 : i32 to vector<1x256xi32>
    %16 = arith.cmpi slt, %12, %15 : vector<1x256xi32>
    %c0_i32 = arith.constant 0 : i32
    %17 = arith.cmpi eq, %arg1, %c0_i32 : i32
    %c0_i32_4 = arith.constant 0 : i32
    %18 = arith.cmpi eq, %arg2, %c0_i32_4 : i32
    %19 = arith.andi %17, %18 : i1
    %20 = arith.extui %19 : i1 to i32
    %c0_i32_5 = arith.constant 0 : i32
    %21 = arith.cmpi ne, %20, %c0_i32_5 : i32
    scf.if %21 {
      %cst = arith.constant 0.000000e+00 : f32
      %33 = vector.broadcast %cst : f32 to vector<128x1xf32>
      %c0_12 = arith.constant 0 : index
      %c0_13 = arith.constant 0 : index
      %34 = vector.load %arg10[%c0_12, %c0_13] : memref<128x1xf32, #tpu.memory_space<vmem>>, vector<128x1xf32>
      tpu.vector_store %arg10[%c0_12, %c0_13], %33 {strides = array<i32>} : memref<128x1xf32, #tpu.memory_space<vmem>>, vector<128x1xf32>,
      %cst_14 = arith.constant 0.000000e+00 : f32
      %35 = vector.broadcast %cst_14 : f32 to vector<128x1xf32>
      %c0_15 = arith.constant 0 : index
      %c0_16 = arith.constant 0 : index
      %36 = vector.load %arg11[%c0_15, %c0_16] : memref<128x1xf32, #tpu.memory_space<vmem>>, vector<128x1xf32>
      tpu.vector_store %arg11[%c0_15, %c0_16], %35 {strides = array<i32>} : memref<128x1xf32, #tpu.memory_space<vmem>>, vector<128x1xf32>,
      %cst_17 = arith.constant 0.000000e+00 : f32
      %37 = vector.broadcast %cst_17 : f32 to vector<128x1xf32>
      %c0_18 = arith.constant 0 : index
      %c0_19 = arith.constant 0 : index
      %38 = vector.load %arg12[%c0_18, %c0_19] : memref<128x1xf32, #tpu.memory_space<vmem>>, vector<128x1xf32>
      tpu.vector_store %arg12[%c0_18, %c0_19], %37 {strides = array<i32>} : memref<128x1xf32, #tpu.memory_space<vmem>>, vector<128x1xf32>,
    } else {
    }
    %c0_i32_6 = arith.constant 0 : i32
    %22 = arith.cmpi eq, %arg1, %c0_i32_6 : i32
    %23 = arith.extui %22 : i1 to i32
    %c0_i32_7 = arith.constant 0 : i32
    %24 = arith.cmpi ne, %23, %c0_i32_7 : i32
    scf.if %24 {
      %c0_12 = arith.constant 0 : index
      %c0_13 = arith.constant 0 : index
      %33 = vector.load %arg3[%c0_12, %c0_13] : memref<128x128xbf16, #tpu.memory_space<vmem>>, vector<128x128xbf16>
      %c0_14 = arith.constant 0 : index
      %c0_15 = arith.constant 0 : index
      %34 = vector.load %arg4[%c0_14, %c0_15] : memref<256x128xbf16, #tpu.memory_space<vmem>>, vector<256x128xbf16>
      %cst = arith.constant dense<0.000000e+00> : vector<128x256xf32>
      %35 = tpu.matmul %33, %34, %cst {dimension_numbers = #tpu.dot_dimension_numbers<[1], [1], [0], [0], [0, 0, 1, 0], [], []>} : vector<128x128xbf16>, vector<256x128xbf16>, vector<128x256xf32> -> vector<128x256xf32>
      %cst_16 = arith.constant 1.000000e+01 : f32
      %36 = vector.broadcast %cst_16 : f32 to vector<128x256xf32>
      %37 = arith.subf %35, %36 : vector<128x256xf32>
      %38 = math.exp %37 : vector<128x256xf32>
      %cst_17 = arith.constant 9.99999974E-6 : f32
      %39 = vector.broadcast %cst_17 : f32 to vector<128x256xf32>
      %40 = arith.addf %38, %39 : vector<128x256xf32>
      %41 = arith.index_cast %arg2 : i32 to index
      %c0_18 = arith.constant 0 : index
      %c0_19 = arith.constant 0 : index
      %42 = vector.load %arg9[%41, %c0_18, %c0_19] : memref<1x128x256xf32, #tpu.memory_space<vmem>>, vector<1x128x256xf32>
      %43 = vector.shape_cast %42 : vector<1x128x256xf32> to vector<128x256xf32>
      %44 = vector.shape_cast %40 : vector<128x256xf32> to vector<1x128x256xf32>
      tpu.vector_store %arg9[%41, %c0_18, %c0_19], %44 {strides = array<i32>} : memref<1x128x256xf32, #tpu.memory_space<vmem>>, vector<1x128x256xf32>,
      %cst_20 = arith.constant dense<true> : vector<1x256xi1>
      %45 = arith.xori %16, %cst_20 : vector<1x256xi1>
      %46 = vector.broadcast %45 : vector<1x256xi1> to vector<128x256xi1>
      %47 = arith.ori %4, %46 : vector<128x256xi1>
      %c0_21 = arith.constant 0 : index
      %c0_22 = arith.constant 0 : index
      %48 = vector.load %arg10[%c0_21, %c0_22] : memref<128x1xf32, #tpu.memory_space<vmem>>, vector<128x1xf32>
      %cst_23 = arith.constant 0.000000e+00 : f32
      %49 = vector.broadcast %cst_23 : f32 to vector<128x256xf32>
      %50 = arith.select %47, %49, %40 : vector<128x256xi1>, vector<128x256xf32>
      %cst_24 = arith.constant dense<0.000000e+00> : vector<128xf32>
      %51 = vector.multi_reduction <add>, %50, %cst_24 [1] : vector<128x256xf32> to vector<128xf32>
      %52 = vector.shape_cast %51 : vector<128xf32> to vector<128x1xf32>
      %53 = arith.addf %48, %52 : vector<128x1xf32>
      %c0_25 = arith.constant 0 : index
      %c0_26 = arith.constant 0 : index
      %54 = vector.load %arg10[%c0_25, %c0_26] : memref<128x1xf32, #tpu.memory_space<vmem>>, vector<128x1xf32>
      tpu.vector_store %arg10[%c0_25, %c0_26], %53 {strides = array<i32>} : memref<128x1xf32, #tpu.memory_space<vmem>>, vector<128x1xf32>,
    } else {
    }
    %c1_i32 = arith.constant 1 : i32
    %25 = arith.cmpi eq, %arg1, %c1_i32 : i32
    %26 = arith.extui %25 : i1 to i32
    %c0_i32_8 = arith.constant 0 : i32
    %27 = arith.cmpi ne, %26, %c0_i32_8 : i32
    scf.if %27 {
      %33 = arith.index_cast %arg2 : i32 to index
      %c0_12 = arith.constant 0 : index
      %c0_13 = arith.constant 0 : index
      %34 = vector.load %arg9[%33, %c0_12, %c0_13] : memref<1x128x256xf32, #tpu.memory_space<vmem>>, vector<1x128x256xf32>
      %35 = vector.shape_cast %34 : vector<1x128x256xf32> to vector<128x256xf32>
      %36 = vector.broadcast %8 : vector<128x1xi32> to vector<128x256xi32>
      %37 = vector.broadcast %12 : vector<1x256xi32> to vector<128x256xi32>
      %38 = arith.cmpi ne, %36, %37 : vector<128x256xi32>
      %39 = arith.andi %4, %38 : vector<128x256xi1>
      %40 = vector.broadcast %14 : vector<128x1xi1> to vector<128x256xi1>
      %41 = vector.broadcast %16 : vector<1x256xi1> to vector<128x256xi1>
      %42 = arith.andi %40, %41 : vector<128x256xi1>
      %43 = arith.andi %39, %42 : vector<128x256xi1>
      %c0_14 = arith.constant 0 : index
      %c0_15 = arith.constant 0 : index
      %44 = vector.load %arg10[%c0_14, %c0_15] : memref<128x1xf32, #tpu.memory_space<vmem>>, vector<128x1xf32>
      %45 = vector.broadcast %44 : vector<128x1xf32> to vector<128x256xf32>
      %46 = arith.addf %45, %35 : vector<128x256xf32>
      %cst = arith.constant 9.99999974E-6 : f32
      %47 = vector.broadcast %cst : f32 to vector<128x256xf32>
      %48 = arith.addf %46, %47 : vector<128x256xf32>
      %cst_16 = arith.constant 1.000000e+00 : f32
      %49 = vector.broadcast %cst_16 : f32 to vector<128x256xf32>
      %50 = arith.divf %49, %35 : vector<128x256xf32>
      %51 = arith.mulf %48, %50 : vector<128x256xf32>
      %52 = math.log %51 : vector<128x256xf32>
      %c0_17 = arith.constant 0 : index
      %c0_18 = arith.constant 0 : index
      %53 = vector.load %arg11[%c0_17, %c0_18] : memref<128x1xf32, #tpu.memory_space<vmem>>, vector<128x1xf32>
      %cst_19 = arith.constant 0.000000e+00 : f32
      %54 = vector.broadcast %cst_19 : f32 to vector<128x256xf32>
      %55 = arith.select %43, %52, %54 : vector<128x256xi1>, vector<128x256xf32>
      %cst_20 = arith.constant dense<0.000000e+00> : vector<128xf32>
      %56 = vector.multi_reduction <add>, %55, %cst_20 [1] : vector<128x256xf32> to vector<128xf32>
      %57 = vector.shape_cast %56 : vector<128xf32> to vector<128x1xf32>
      %58 = arith.addf %53, %57 : vector<128x1xf32>
      %c0_21 = arith.constant 0 : index
      %c0_22 = arith.constant 0 : index
      %59 = vector.load %arg11[%c0_21, %c0_22] : memref<128x1xf32, #tpu.memory_space<vmem>>, vector<128x1xf32>
      tpu.vector_store %arg11[%c0_21, %c0_22], %58 {strides = array<i32>} : memref<128x1xf32, #tpu.memory_space<vmem>>, vector<128x1xf32>,
      %c0_23 = arith.constant 0 : index
      %c0_24 = arith.constant 0 : index
      %60 = vector.load %arg12[%c0_23, %c0_24] : memref<128x1xf32, #tpu.memory_space<vmem>>, vector<128x1xf32>
      %cst_25 = arith.constant 1.000000e+00 : f32
      %cst_26 = arith.constant 0.000000e+00 : f32
      %61 = vector.broadcast %cst_25 : f32 to vector<128x256xf32>
      %62 = vector.broadcast %cst_26 : f32 to vector<128x256xf32>
      %63 = arith.select %43, %61, %62 : vector<128x256xi1>, vector<128x256xf32>
      %cst_27 = arith.constant dense<0.000000e+00> : vector<128xf32>
      %64 = vector.multi_reduction <add>, %63, %cst_27 [1] : vector<128x256xf32> to vector<128xf32>
      %65 = vector.shape_cast %64 : vector<128xf32> to vector<128x1xf32>
      %66 = arith.addf %60, %65 : vector<128x1xf32>
      %c0_28 = arith.constant 0 : index
      %c0_29 = arith.constant 0 : index
      %67 = vector.load %arg12[%c0_28, %c0_29] : memref<128x1xf32, #tpu.memory_space<vmem>>, vector<128x1xf32>
      tpu.vector_store %arg12[%c0_28, %c0_29], %66 {strides = array<i32>} : memref<128x1xf32, #tpu.memory_space<vmem>>, vector<128x1xf32>,
    } else {
    }
    %c1_i32_9 = arith.constant 1 : i32
    %28 = arith.cmpi eq, %arg1, %c1_i32_9 : i32
    %c0_i32_10 = arith.constant 0 : i32
    %29 = arith.cmpi eq, %arg2, %c0_i32_10 : i32
    %30 = arith.andi %28, %29 : i1
    %31 = arith.extui %30 : i1 to i32
    %c0_i32_11 = arith.constant 0 : i32
    %32 = arith.cmpi ne, %31, %c0_i32_11 : i32
    scf.if %32 {
      %c0_12 = arith.constant 0 : index
      %c0_13 = arith.constant 0 : index
      %33 = vector.load %arg11[%c0_12, %c0_13] : memref<128x1xf32, #tpu.memory_space<vmem>>, vector<128x1xf32>
      %c0_14 = arith.constant 0 : index
      %c0_15 = arith.constant 0 : index
      %34 = vector.load %arg7[%c0_14, %c0_15] : memref<128x1xf32, #tpu.memory_space<vmem>>, vector<128x1xf32>
      tpu.vector_store %arg7[%c0_14, %c0_15], %33 {strides = array<i32>} : memref<128x1xf32, #tpu.memory_space<vmem>>, vector<128x1xf32>,
      %c0_16 = arith.constant 0 : index
      %c0_17 = arith.constant 0 : index
      %35 = vector.load %arg12[%c0_16, %c0_17] : memref<128x1xf32, #tpu.memory_space<vmem>>, vector<128x1xf32>
      %c0_18 = arith.constant 0 : index
      %c0_19 = arith.constant 0 : index
      %36 = vector.load %arg8[%c0_18, %c0_19] : memref<128x1xf32, #tpu.memory_space<vmem>>, vector<128x1xf32>
      tpu.vector_store %arg8[%c0_18, %c0_19], %35 {strides = array<i32>} : memref<128x1xf32, #tpu.memory_space<vmem>>, vector<128x1xf32>,
    } else {
    }
    return
  }
  func.func @transform_0(%arg0: i32, %arg1: i32, %arg2: i32) -> (i32, i32) {
    %c0_i32 = arith.constant 0 : i32
    %c0_i32_0 = arith.constant 0 : i32
    return %arg0, %c0_i32 : i32, i32
  }
  func.func @transform_1(%arg0: i32, %arg1: i32, %arg2: i32) -> (i32, i32) {
    %c1_i32 = arith.constant 1 : i32
    %0 = arith.subi %c1_i32, %arg1 : i32
    %1 = arith.muli %arg2, %0 : i32
    %c0_i32 = arith.constant 0 : i32
    %c0_i32_0 = arith.constant 0 : i32
    return %1, %c0_i32 : i32, i32
  }
  func.func @transform_2(%arg0: i32, %arg1: i32, %arg2: i32) -> (i32, i32) {
    %c0_i32 = arith.constant 0 : i32
    %c0_i32_0 = arith.constant 0 : i32
    return %arg0, %c0_i32 : i32, i32
  }
  func.func @transform_3(%arg0: i32, %arg1: i32, %arg2: i32) -> (i32, i32) {
    %c0_i32 = arith.constant 0 : i32
    %c0_i32_0 = arith.constant 0 : i32
    return %c0_i32, %arg2 : i32, i32
  }
  func.func @transform_4(%arg0: i32, %arg1: i32, %arg2: i32) -> (i32, i32) {
    %c0_i32 = arith.constant 0 : i32
    %c0_i32_0 = arith.constant 0 : i32
    return %arg0, %c0_i32 : i32, i32
  }
  func.func @transform_5(%arg0: i32, %arg1: i32, %arg2: i32) -> (i32, i32) {
    %c0_i32 = arith.constant 0 : i32
    %c0_i32_0 = arith.constant 0 : i32
    return %arg0, %c0_i32 : i32, i32
  }
}

</mosaic_0001>

<llo_original>
// kernel: supervised_contrastive_loss.2
$region0: #{supervised_contrastive_loss.2}
  #allocation0 [shape = 'u32[]', space=smem, size = 0x4, offset = 0x4, fixed_abs, tag = 'smem constant byte address 0x4 - core index']
  #allocation1 [shape = 'u32[144,128]{1,0:T(1,128)}', space=vmem, size = 0x12000, scoped, tag = 'internal scratch']
  %s0 = inlined_call_operand.vmem [shape: f32[256,128], index: 0, kind: input, shape index: {}]
  %s1 = inlined_call_operand.vmem [shape: bf16[256,128], index: 1, kind: output, shape index: {}]
  %s2 = sld [smem:[#allocation0]]
  $region14: #{supervised_contrastive_loss.2} parent=0
    _
  %s4 = ssub.s32 1, %s2
  %s5 = scalar_select 0, %s4, %s2
  // Predicated region
  $region2: #{supervised_contrastive_loss.2} parent=0 // pred_check
    _
  $region3: #{supervised_contrastive_loss.2} parent=0 // pred_check_branch
    %7 = sbr.rel (0) target = $region5
  $region4: #{supervised_contrastive_loss.2} parent=0 // pred_region
    _
  $region5: #{supervised_contrastive_loss.2} parent=0 // pred_fallthru
    _
  %v8 = vld [vmem:[%s0] sm:$0xff]
  %v9 = vld [vmem:[%s0 + $0x8] sm:$0xff]
  %v10 = vld [vmem:[%s0 + $0x10] sm:$0xff]
  %v11 = vld [vmem:[%s0 + $0x18] sm:$0xff]
  %v12 = vld [vmem:[%s0 + $0x20] sm:$0xff]
  %v13 = vld [vmem:[%s0 + $0x28] sm:$0xff]
  %v14 = vld [vmem:[%s0 + $0x30] sm:$0xff]
  %v15 = vld [vmem:[%s0 + $0x38] sm:$0xff]
  %v16 = vld [vmem:[%s0 + $0x40] sm:$0xff]
  %v17 = vld [vmem:[%s0 + $0x48] sm:$0xff]
  %v18 = vld [vmem:[%s0 + $0x50] sm:$0xff]
  %v19 = vld [vmem:[%s0 + $0x58] sm:$0xff]
  %v20 = vld [vmem:[%s0 + $0x60] sm:$0xff]
  %v21 = vld [vmem:[%s0 + $0x68] sm:$0xff]
  %v22 = vld [vmem:[%s0 + $0x70] sm:$0xff]
  %v23 = vld [vmem:[%s0 + $0x78] sm:$0xff]
  %v24 = vld [vmem:[%s0 + $0x80] sm:$0xff]
  %v25 = vld [vmem:[%s0 + $0x88] sm:$0xff]
  %v26 = vld [vmem:[%s0 + $0x90] sm:$0xff]
  %v27 = vld [vmem:[%s0 + $0x98] sm:$0xff]
  %v28 = vld [vmem:[%s0 + $0xa0] sm:$0xff]
  %v29 = vld [vmem:[%s0 + $0xa8] sm:$0xff]
  %v30 = vld [vmem:[%s0 + $0xb0] sm:$0xff]
  %v31 = vld [vmem:[%s0 + $0xb8] sm:$0xff]
  %v32 = vld [vmem:[%s0 + $0xc0] sm:$0xff]
  %v33 = vld [vmem:[%s0 + $0xc8] sm:$0xff]
  %v34 = vld [vmem:[%s0 + $0xd0] sm:$0xff]
  %v35 = vld [vmem:[%s0 + $0xd8] sm:$0xff]
  %v36 = vld [vmem:[%s0 + $0xe0] sm:$0xff]
  %v37 = vld [vmem:[%s0 + $0xe8] sm:$0xff]
  %v38 = vld [vmem:[%s0 + $0xf0] sm:$0xff]
  %v39 = vld [vmem:[%s0 + $0xf8] sm:$0xff]
  %v40 = vmul.f32 %v8, %v8
  %v41 = vmul.f32 %v9, %v9
  %v42 = vmul.f32 %v10, %v10
  %v43 = vmul.f32 %v11, %v11
  %v44 = vmul.f32 %v12, %v12
  %v45 = vmul.f32 %v13, %v13
  %v46 = vmul.f32 %v14, %v14
  %v47 = vmul.f32 %v15, %v15
  %v48 = vmul.f32 %v16, %v16
  %v49 = vmul.f32 %v17, %v17
  %v50 = vmul.f32 %v18, %v18
  %v51 = vmul.f32 %v19, %v19
  %v52 = vmul.f32 %v20, %v20
  %v53 = vmul.f32 %v21, %v21
  %v54 = vmul.f32 %v22, %v22
  %v55 = vmul.f32 %v23, %v23
  %v56 = vmul.f32 %v24, %v24
  %v57 = vmul.f32 %v25, %v25
  %v58 = vmul.f32 %v26, %v26
  %v59 = vmul.f32 %v27, %v27
  %v60 = vmul.f32 %v28, %v28
  %v61 = vmul.f32 %v29, %v29
  %v62 = vmul.f32 %v30, %v30
  %v63 = vmul.f32 %v31, %v31
  %v64 = vmul.f32 %v32, %v32
  %v65 = vmul.f32 %v33, %v33
  %v66 = vmul.f32 %v34, %v34
  %v67 = vmul.f32 %v35, %v35
  %v68 = vmul.f32 %v36, %v36
  %v69 = vmul.f32 %v37, %v37
  %v70 = vmul.f32 %v38, %v38
  %v71 = vmul.f32 %v39, %v39
  %72 = vadd.xlane.f32.xlu0 %v40
  %v73 = vpop.xlane.xlu0 %72
  %74 = vadd.xlane.f32.xlu0 %v41
  %v75 = vpop.xlane.xlu0 %74
  %76 = vadd.xlane.f32.xlu0 %v42
  %v77 = vpop.xlane.xlu0 %76
  %78 = vadd.xlane.f32.xlu0 %v43
  %v79 = vpop.xlane.xlu0 %78
  %80 = vadd.xlane.f32.xlu0 %v44
  %v81 = vpop.xlane.xlu0 %80
  %82 = vadd.xlane.f32.xlu0 %v45
  %v83 = vpop.xlane.xlu0 %82
  %84 = vadd.xlane.f32.xlu0 %v46
  %v85 = vpop.xlane.xlu0 %84
  %86 = vadd.xlane.f32.xlu0 %v47
  %v87 = vpop.xlane.xlu0 %86
  %88 = vadd.xlane.f32.xlu0 %v48
  %v89 = vpop.xlane.xlu0 %88
  %90 = vadd.xlane.f32.xlu0 %v49
  %v91 = vpop.xlane.xlu0 %90
  %92 = vadd.xlane.f32.xlu0 %v50
  %v93 = vpop.xlane.xlu0 %92
  %94 = vadd.xlane.f32.xlu0 %v51
  %v95 = vpop.xlane.xlu0 %94
  %96 = vadd.xlane.f32.xlu0 %v52
  %v97 = vpop.xlane.xlu0 %96
  %98 = vadd.xlane.f32.xlu0 %v53
  %v99 = vpop.xlane.xlu0 %98
  %100 = vadd.xlane.f32.xlu0 %v54
  %v101 = vpop.xlane.xlu0 %100
  %102 = vadd.xlane.f32.xlu0 %v55
  %v103 = vpop.xlane.xlu0 %102
  %104 = vadd.xlane.f32.xlu0 %v56
  %v105 = vpop.xlane.xlu0 %104
  %106 = vadd.xlane.f32.xlu0 %v57
  %v107 = vpop.xlane.xlu0 %106
  %108 = vadd.xlane.f32.xlu0 %v58
  %v109 = vpop.xlane.xlu0 %108
  %110 = vadd.xlane.f32.xlu0 %v59
  %v111 = vpop.xlane.xlu0 %110
  %112 = vadd.xlane.f32.xlu0 %v60
  %v113 = vpop.xlane.xlu0 %112
  %114 = vadd.xlane.f32.xlu0 %v61
  %v115 = vpop.xlane.xlu0 %114
  %116 = vadd.xlane.f32.xlu0 %v62
  %v117 = vpop.xlane.xlu0 %116
  %118 = vadd.xlane.f32.xlu0 %v63
  %v119 = vpop.xlane.xlu0 %118
  %120 = vadd.xlane.f32.xlu0 %v64
  %v121 = vpop.xlane.xlu0 %120
  %122 = vadd.xlane.f32.xlu0 %v65
  %v123 = vpop.xlane.xlu0 %122
  %124 = vadd.xlane.f32.xlu0 %v66
  %v125 = vpop.xlane.xlu0 %124
  %126 = vadd.xlane.f32.xlu0 %v67
  %v127 = vpop.xlane.xlu0 %126
  %128 = vadd.xlane.f32.xlu0 %v68
  %v129 = vpop.xlane.xlu0 %128
  %130 = vadd.xlane.f32.xlu0 %v69
  %v131 = vpop.xlane.xlu0 %130
  %132 = vadd.xlane.f32.xlu0 %v70
  %v133 = vpop.xlane.xlu0 %132
  %134 = vadd.xlane.f32.xlu0 %v71
  %v135 = vpop.xlane.xlu0 %134
  %v136 = vmax.f32 %v73, 1e-16
  %v137 = vmax.f32 %v75, 1e-16
  %v138 = vmax.f32 %v77, 1e-16
  %v139 = vmax.f32 %v79, 1e-16
  %v140 = vmax.f32 %v81, 1e-16
  %v141 = vmax.f32 %v83, 1e-16
  %v142 = vmax.f32 %v85, 1e-16
  %v143 = vmax.f32 %v87, 1e-16
  %v144 = vmax.f32 %v89, 1e-16
  %v145 = vmax.f32 %v91, 1e-16
  %v146 = vmax.f32 %v93, 1e-16
  %v147 = vmax.f32 %v95, 1e-16
  %v148 = vmax.f32 %v97, 1e-16
  %v149 = vmax.f32 %v99, 1e-16
  %v150 = vmax.f32 %v101, 1e-16
  %v151 = vmax.f32 %v103, 1e-16
  %v152 = vmax.f32 %v105, 1e-16
  %v153 = vmax.f32 %v107, 1e-16
  %v154 = vmax.f32 %v109, 1e-16
  %v155 = vmax.f32 %v111, 1e-16
  %v156 = vmax.f32 %v113, 1e-16
  %v157 = vmax.f32 %v115, 1e-16
  %v158 = vmax.f32 %v117, 1e-16
  %v159 = vmax.f32 %v119, 1e-16
  %v160 = vmax.f32 %v121, 1e-16
  %v161 = vmax.f32 %v123, 1e-16
  %v162 = vmax.f32 %v125, 1e-16
  %v163 = vmax.f32 %v127, 1e-16
  %v164 = vmax.f32 %v129, 1e-16
  %v165 = vmax.f32 %v131, 1e-16
  %v166 = vmax.f32 %v133, 1e-16
  %v167 = vmax.f32 %v135, 1e-16
  %v168 = vrsqrt.pop %v136
  %v169 = vrsqrt.pop %v137
  %v170 = vrsqrt.pop %v138
  %v171 = vrsqrt.pop %v139
  %v172 = vrsqrt.pop %v140
  %v173 = vrsqrt.pop %v141
  %v174 = vrsqrt.pop %v142
  %v175 = vrsqrt.pop %v143
  %v176 = vrsqrt.pop %v144
  %v177 = vrsqrt.pop %v145
  %v178 = vrsqrt.pop %v146
  %v179 = vrsqrt.pop %v147
  %v180 = vrsqrt.pop %v148
  %v181 = vrsqrt.pop %v149
  %v182 = vrsqrt.pop %v150
  %v183 = vrsqrt.pop %v151
  %v184 = vrsqrt.pop %v152
  %v185 = vrsqrt.pop %v153
  %v186 = vrsqrt.pop %v154
  %v187 = vrsqrt.pop %v155
  %v188 = vrsqrt.pop %v156
  %v189 = vrsqrt.pop %v157
  %v190 = vrsqrt.pop %v158
  %v191 = vrsqrt.pop %v159
  %v192 = vrsqrt.pop %v160
  %v193 = vrsqrt.pop %v161
  %v194 = vrsqrt.pop %v162
  %v195 = vrsqrt.pop %v163
  %v196 = vrsqrt.pop %v164
  %v197 = vrsqrt.pop %v165
  %v198 = vrsqrt.pop %v166
  %v199 = vrsqrt.pop %v167
  %v200 = vmul.f32 %v168, 3.1622777
  %v201 = vmul.f32 %v169, 3.1622777
  %v202 = vmul.f32 %v170, 3.1622777
  %v203 = vmul.f32 %v171, 3.1622777
  %v204 = vmul.f32 %v172, 3.1622777
  %v205 = vmul.f32 %v173, 3.1622777
  %v206 = vmul.f32 %v174, 3.1622777
  %v207 = vmul.f32 %v175, 3.1622777
  %v208 = vmul.f32 %v176, 3.1622777
  %v209 = vmul.f32 %v177, 3.1622777
  %v210 = vmul.f32 %v178, 3.1622777
  %v211 = vmul.f32 %v179, 3.1622777
  %v212 = vmul.f32 %v180, 3.1622777
  %v213 = vmul.f32 %v181, 3.1622777
  %v214 = vmul.f32 %v182, 3.1622777
  %v215 = vmul.f32 %v183, 3.1622777
  %v216 = vmul.f32 %v184, 3.1622777
  %v217 = vmul.f32 %v185, 3.1622777
  %v218 = vmul.f32 %v186, 3.1622777
  %v219 = vmul.f32 %v187, 3.1622777
  %v220 = vmul.f32 %v188, 3.1622777
  %v221 = vmul.f32 %v189, 3.1622777
  %v222 = vmul.f32 %v190, 3.1622777
  %v223 = vmul.f32 %v191, 3.1622777
  %v224 = vmul.f32 %v192, 3.1622777
  %v225 = vmul.f32 %v193, 3.1622777
  %v226 = vmul.f32 %v194, 3.1622777
  %v227 = vmul.f32 %v195, 3.1622777
  %v228 = vmul.f32 %v196, 3.1622777
  %v229 = vmul.f32 %v197, 3.1622777
  %v230 = vmul.f32 %v198, 3.1622777
  %v231 = vmul.f32 %v199, 3.1622777
  %v232 = vmul.f32 %v8, %v200
  %v233 = vmul.f32 %v9, %v201
  %v234 = vmul.f32 %v10, %v202
  %v235 = vmul.f32 %v11, %v203
  %v236 = vmul.f32 %v12, %v204
  %v237 = vmul.f32 %v13, %v205
  %v238 = vmul.f32 %v14, %v206
  %v239 = vmul.f32 %v15, %v207
  %v240 = vmul.f32 %v16, %v208
  %v241 = vmul.f32 %v17, %v209
  %v242 = vmul.f32 %v18, %v210
  %v243 = vmul.f32 %v19, %v211
  %v244 = vmul.f32 %v20, %v212
  %v245 = vmul.f32 %v21, %v213
  %v246 = vmul.f32 %v22, %v214
  %v247 = vmul.f32 %v23, %v215
  %v248 = vmul.f32 %v24, %v216
  %v249 = vmul.f32 %v25, %v217
  %v250 = vmul.f32 %v26, %v218
  %v251 = vmul.f32 %v27, %v219
  %v252 = vmul.f32 %v28, %v220
  %v253 = vmul.f32 %v29, %v221
  %v254 = vmul.f32 %v30, %v222
  %v255 = vmul.f32 %v31, %v223
  %v256 = vmul.f32 %v32, %v224
  %v257 = vmul.f32 %v33, %v225
  %v258 = vmul.f32 %v34, %v226
  %v259 = vmul.f32 %v35, %v227
  %v260 = vmul.f32 %v36, %v228
  %v261 = vmul.f32 %v37, %v229
  %v262 = vmul.f32 %v38, %v230
  %v263 = vmul.f32 %v39, %v231
  %v264 = vpack.c.bf16 %v233, %v232
  %v265 = vpack.c.bf16 %v235, %v234
  %v266 = vpack.c.bf16 %v237, %v236
  %v267 = vpack.c.bf16 %v239, %v238
  %v268 = vpack.c.bf16 %v241, %v240
  %v269 = vpack.c.bf16 %v243, %v242
  %v270 = vpack.c.bf16 %v245, %v244
  %v271 = vpack.c.bf16 %v247, %v246
  %v272 = vpack.c.bf16 %v249, %v248
  %v273 = vpack.c.bf16 %v251, %v250
  %v274 = vpack.c.bf16 %v253, %v252
  %v275 = vpack.c.bf16 %v255, %v254
  %v276 = vpack.c.bf16 %v257, %v256
  %v277 = vpack.c.bf16 %v259, %v258
  %v278 = vpack.c.bf16 %v261, %v260
  %v279 = vpack.c.bf16 %v263, %v262
  %v296 = vunpack.c.l.b16 %v264
  %v297 = vunpack.c.h.b16 %v264
  %v298 = vunpack.c.l.b16 %v265
  %v299 = vunpack.c.h.b16 %v265
  %v300 = vunpack.c.l.b16 %v266
  %v301 = vunpack.c.h.b16 %v266
  %v302 = vunpack.c.l.b16 %v267
  %v303 = vunpack.c.h.b16 %v267
  %v304 = vunpack.c.l.b16 %v268
  %v305 = vunpack.c.h.b16 %v268
  %v306 = vunpack.c.l.b16 %v269
  %v307 = vunpack.c.h.b16 %v269
  %v308 = vunpack.c.l.b16 %v270
  %v309 = vunpack.c.h.b16 %v270
  %v310 = vunpack.c.l.b16 %v271
  %v311 = vunpack.c.h.b16 %v271
  %v312 = vunpack.c.l.b16 %v272
  %v313 = vunpack.c.h.b16 %v272
  %v314 = vunpack.c.l.b16 %v273
  %v315 = vunpack.c.h.b16 %v273
  %v316 = vunpack.c.l.b16 %v274
  %v317 = vunpack.c.h.b16 %v274
  %v318 = vunpack.c.l.b16 %v275
  %v319 = vunpack.c.h.b16 %v275
  %v320 = vunpack.c.l.b16 %v276
  %v321 = vunpack.c.h.b16 %v276
  %v322 = vunpack.c.l.b16 %v277
  %v323 = vunpack.c.h.b16 %v277
  %v324 = vunpack.c.l.b16 %v278
  %v325 = vunpack.c.h.b16 %v278
  %v326 = vunpack.c.l.b16 %v279
  %v327 = vunpack.c.h.b16 %v279
  %v328 = vpack.c.b16 %v296, %v296
  %v329 = vpack.c.b16 %v297, %v297
  %v330 = vpack.c.b16 %v298, %v298
  %v331 = vpack.c.b16 %v299, %v299
  %v332 = vpack.c.b16 %v300, %v300
  %v333 = vpack.c.b16 %v301, %v301
  %v334 = vpack.c.b16 %v302, %v302
  %v335 = vpack.c.b16 %v303, %v303
  %v336 = vpack.c.b16 %v304, %v304
  %v337 = vpack.c.b16 %v305, %v305
  %v338 = vpack.c.b16 %v306, %v306
  %v339 = vpack.c.b16 %v307, %v307
  %v340 = vpack.c.b16 %v308, %v308
  %v341 = vpack.c.b16 %v309, %v309
  %v342 = vpack.c.b16 %v310, %v310
  %v343 = vpack.c.b16 %v311, %v311
  %v344 = vpack.c.b16 %v312, %v312
  %v345 = vpack.c.b16 %v313, %v313
  %v346 = vpack.c.b16 %v314, %v314
  %v347 = vpack.c.b16 %v315, %v315
  %v348 = vpack.c.b16 %v316, %v316
  %v349 = vpack.c.b16 %v317, %v317
  %v350 = vpack.c.b16 %v318, %v318
  %v351 = vpack.c.b16 %v319, %v319
  %v352 = vpack.c.b16 %v320, %v320
  %v353 = vpack.c.b16 %v321, %v321
  %v354 = vpack.c.b16 %v322, %v322
  %v355 = vpack.c.b16 %v323, %v323
  %v356 = vpack.c.b16 %v324, %v324
  %v357 = vpack.c.b16 %v325, %v325
  %v358 = vpack.c.b16 %v326, %v326
  %v359 = vpack.c.b16 %v327, %v327
  %392 = vst [vmem:[%s1] sm:$0xf] %v328
  %393 = vst [vmem:[%s1 + $0x4] sm:$0xf] %v329
  %394 = vst [vmem:[%s1 + $0x8] sm:$0xf] %v330
  %395 = vst [vmem:[%s1 + $0xc] sm:$0xf] %v331
  %396 = vst [vmem:[%s1 + $0x10] sm:$0xf] %v332
  %397 = vst [vmem:[%s1 + $0x14] sm:$0xf] %v333
  %398 = vst [vmem:[%s1 + $0x18] sm:$0xf] %v334
  %399 = vst [vmem:[%s1 + $0x1c] sm:$0xf] %v335
  %400 = vst [vmem:[%s1 + $0x20] sm:$0xf] %v336
  %401 = vst [vmem:[%s1 + $0x24] sm:$0xf] %v337
  %402 = vst [vmem:[%s1 + $0x28] sm:$0xf] %v338
  %403 = vst [vmem:[%s1 + $0x2c] sm:$0xf] %v339
  %404 = vst [vmem:[%s1 + $0x30] sm:$0xf] %v340
  %405 = vst [vmem:[%s1 + $0x34] sm:$0xf] %v341
  %406 = vst [vmem:[%s1 + $0x38] sm:$0xf] %v342
  %407 = vst [vmem:[%s1 + $0x3c] sm:$0xf] %v343
  %408 = vst [vmem:[%s1 + $0x40] sm:$0xf] %v344
  %409 = vst [vmem:[%s1 + $0x44] sm:$0xf] %v345
  %410 = vst [vmem:[%s1 + $0x48] sm:$0xf] %v346
  %411 = vst [vmem:[%s1 + $0x4c] sm:$0xf] %v347
  %412 = vst [vmem:[%s1 + $0x50] sm:$0xf] %v348
  %413 = vst [vmem:[%s1 + $0x54] sm:$0xf] %v349
  %414 = vst [vmem:[%s1 + $0x58] sm:$0xf] %v350
  %415 = vst [vmem:[%s1 + $0x5c] sm:$0xf] %v351
  %416 = vst [vmem:[%s1 + $0x60] sm:$0xf] %v352
  %417 = vst [vmem:[%s1 + $0x64] sm:$0xf] %v353
  %418 = vst [vmem:[%s1 + $0x68] sm:$0xf] %v354
  %419 = vst [vmem:[%s1 + $0x6c] sm:$0xf] %v355
  %420 = vst [vmem:[%s1 + $0x70] sm:$0xf] %v356
  %421 = vst [vmem:[%s1 + $0x74] sm:$0xf] %v357
  %422 = vst [vmem:[%s1 + $0x78] sm:$0xf] %v358
  %423 = vst [vmem:[%s1 + $0x7c] sm:$0xf] %v359
  // Predicated region
  $region6: #{supervised_contrastive_loss.2} parent=0 // pred_check
    _
  $region7: #{supervised_contrastive_loss.2} parent=0 // pred_check_branch
    %425 = sbr.rel (0) target = $region9
  $region8: #{supervised_contrastive_loss.2} parent=0 // pred_region
    _
  $region9: #{supervised_contrastive_loss.2} parent=0 // pred_fallthru
    _
  // Predicated region
  $region10: #{supervised_contrastive_loss.2} parent=0 // pred_check
    _
  $region11: #{supervised_contrastive_loss.2} parent=0 // pred_check_branch
    %427 = sbr.rel (0) target = $region13
  $region12: #{supervised_contrastive_loss.2} parent=0 // pred_region
    _
  $region13: #{supervised_contrastive_loss.2} parent=0 // pred_fallthru
    _

// kernel: supervised_contrastive_loss.3
$region0: #{supervised_contrastive_loss.3}
  #allocation0 [shape = 'u32[]', space=smem, size = 0x4, offset = 0x4, fixed_abs, tag = 'smem constant byte address 0x4 - core index']
  #allocation1 [shape = 'u32[144,128]{1,0:T(1,128)}', space=vmem, size = 0x12000, scoped, tag = 'internal scratch']
  #allocation2 [shape = 'f32[1,128,256]{2,1,0:T(8,128)}', space=vmem, size = 0x20000, scoped, tag = 'scratch operand']
  #allocation3 [shape = 'f32[128,1]{1,0:T(8,128)}', space=vmem, size = 0x10000, scoped, tag = 'scratch operand']
  #allocation4 [shape = 'f32[128,1]{1,0:T(8,128)}', space=vmem, size = 0x10000, scoped, tag = 'scratch operand']
  #allocation5 [shape = 'f32[128,1]{1,0:T(8,128)}', space=vmem, size = 0x10000, scoped, tag = 'scratch operand']
  %s0 = inlined_call_operand.vmem [shape: bf16[256,128], index: 0, kind: input, shape index: {}, may-alias: {0,1}]
  %s1 = inlined_call_operand.vmem [shape: bf16[256,128], index: 1, kind: input, shape index: {}, may-alias: {0,1}]
  %s2 = inlined_call_operand.vmem [shape: s32[256,1], index: 2, kind: input, shape index: {}]
  %s3 = inlined_call_operand.vmem [shape: s32[1,256], index: 3, kind: input, shape index: {}]
  %s4 = inlined_call_operand.vmem [shape: f32[256,1], index: 4, kind: output, shape index: {0}]
  %s5 = inlined_call_operand.vmem [shape: f32[256,1], index: 5, kind: output, shape index: {1}]
  %6 = xla_tuple %s4, %s5
  %s7 = sld [smem:[#allocation0]]
  $region73: #{supervised_contrastive_loss.3} parent=0
    _
  %s9 = ssub.s32 1, %s7
  %s10 = scalar_select 0, %s9, %s7
  loop: start=0, step=1, limit=6
  $region2: #{supervised_contrastive_loss.3} parent=0 // loop_pre_header
    _
  $region3: #{supervised_contrastive_loss.3} parent=0 // loop_header
    %s12 = sphi 0, %s16
    %p13 = scmp.ge.s32.totalorder %s12, 6
    %s19 = sphi 0, %s38
    %s20 = sphi 0, %s34
    %s21 = sphi 0, %s30
    %s22 = sphi 0, %s19
    %s23 = sphi 0, %s20
    %s24 = sphi 0, %s21
    %s25 = sphi 0, %s22
    %s26 = sphi 0, %s23
    %s27 = sphi 0, %s24
    %s41 = sphi 0, %s43
    %s44 = sphi 0, %s41
    %s45 = sphi 0, %s44
    %s61 = sphi 0, %s45
    %s71 = sphi 0, %s73
    %s74 = sphi 0, %s71
    %s75 = sphi 0, %s74
    %s91 = sphi 0, %s75
    %s97 = sphi 0, %s99
    %s100 = sphi 0, %s97
    %s101 = sphi 0, %s100
    %s117 = sphi 0, %s101
    %s123 = sphi 0, %s125
    %s126 = sphi 0, %s123
    %s127 = sphi 0, %s126
    %s143 = sphi 0, %s127
    %s149 = sphi 0, %s151
    %s152 = sphi 0, %s149
    %s153 = sphi 0, %s152
    %s169 = sphi 0, %s153
    %s175 = sphi 0, %s177
    %s178 = sphi 0, %s175
    %s179 = sphi 0, %s178
    %s195 = sphi 0, %s179
  $region4: #{supervised_contrastive_loss.3} parent=0 // loop_header_branch
    %15 = sbr.rel (%p13) target = $region8
  $region5: #{supervised_contrastive_loss.3} parent=0 // loop_body
    %s17 = ssub.s32 %s12, 1
    %s18 = ssub.s32 %s12, 2
    %s28 = sadd.s32 1, %s21
    %p29 = scmp.ge.s32.totalorder %s28, 1
    %s30 = scalar_select %p29, 0, %s28
    %s31 = sadd.s32 1, %s20
    %s32 = scalar_select %p29, %s31, %s20
    %p33 = scmp.ge.s32.totalorder %s32, 2
    %s34 = scalar_select %p33, 0, %s32
    %s35 = sadd.s32 1, %s19
    %s36 = scalar_select %p33, %s35, %s19
    %p37 = scmp.ge.s32.totalorder %s36, 2
    %s38 = scalar_select %p37, 0, %s36
    %s39 = ssub.s32 %s19, %s38
    %p40 = scmp.eq.s32.totalorder %s39, 0
    %s42 = sadd.s32 %s41, 1
    %s43 = scalar_select %p40, %s41, %s42
    %p46 = pneg %p40
    %p47 = scmp.eq.s32.totalorder %s12, 3
    %p48 = por %p46, %p47
    %p49 = scmp.ne.s32.totalorder %s41, %s44
    %p50 = scmp.eq.s32.totalorder %s12, 0
    %p51 = por %p49, %p50
    %p52 = scmp.ne.s32.totalorder %s41, %s44
    %p53 = scmp.eq.s32.totalorder %s17, 3
    %p54 = por %p52, %p53
    %p55 = scmp.ne.s32.totalorder %s44, %s45
    %p56 = scmp.eq.s32.totalorder %s17, 0
    %p57 = por %p55, %p56
    %p58 = scmp.ne.s32.totalorder %s44, %s45
    %p59 = scmp.eq.s32.totalorder %s18, 3
    %p60 = por %p58, %p59
    %p62 = scmp.ne.s32.totalorder %s45, %s61
    %p63 = scmp.eq.s32.totalorder %s18, 0
    %p64 = por %p62, %p63
    %s65 = ssub.s32 1, %s20
    %s66 = smul.u32 %s21, %s65
    %s67 = ssub.s32 1, %s34
    %s68 = smul.u32 %s30, %s67
    %s69 = ssub.s32 %s66, %s68
    %p70 = scmp.eq.s32.totalorder %s69, 0
    %s72 = sadd.s32 %s71, 1
    %s73 = scalar_select %p70, %s71, %s72
    %p76 = pneg %p70
    %p77 = scmp.eq.s32.totalorder %s12, 3
    %p78 = por %p76, %p77
    %p79 = scmp.ne.s32.totalorder %s71, %s74
    %p80 = scmp.eq.s32.totalorder %s12, 0
    %p81 = por %p79, %p80
    %p82 = scmp.ne.s32.totalorder %s71, %s74
    %p83 = scmp.eq.s32.totalorder %s17, 3
    %p84 = por %p82, %p83
    %p85 = scmp.ne.s32.totalorder %s74, %s75
    %p86 = scmp.eq.s32.totalorder %s17, 0
    %p87 = por %p85, %p86
    %p88 = scmp.ne.s32.totalorder %s74, %s75
    %p89 = scmp.eq.s32.totalorder %s18, 3
    %p90 = por %p88, %p89
    %p92 = scmp.ne.s32.totalorder %s75, %s91
    %p93 = scmp.eq.s32.totalorder %s18, 0
    %p94 = por %p92, %p93
    %s95 = ssub.s32 %s19, %s38
    %p96 = scmp.eq.s32.totalorder %s95, 0
    %s98 = sadd.s32 %s97, 1
    %s99 = scalar_select %p96, %s97, %s98
    %p102 = pneg %p96
    %p103 = scmp.eq.s32.totalorder %s12, 3
    %p104 = por %p102, %p103
    %p105 = scmp.ne.s32.totalorder %s97, %s100
    %p106 = scmp.eq.s32.totalorder %s12, 0
    %p107 = por %p105, %p106
    %p108 = scmp.ne.s32.totalorder %s97, %s100
    %p109 = scmp.eq.s32.totalorder %s17, 3
    %p110 = por %p108, %p109
    %p111 = scmp.ne.s32.totalorder %s100, %s101
    %p112 = scmp.eq.s32.totalorder %s17, 0
    %p113 = por %p111, %p112
    %p114 = scmp.ne.s32.totalorder %s100, %s101
    %p115 = scmp.eq.s32.totalorder %s18, 3
    %p116 = por %p114, %p115
    %p118 = scmp.ne.s32.totalorder %s101, %s117
    %p119 = scmp.eq.s32.totalorder %s18, 0
    %p120 = por %p118, %p119
    %s121 = ssub.s32 %s21, %s30
    %p122 = scmp.eq.s32.totalorder %s121, 0
    %s124 = sadd.s32 %s123, 1
    %s125 = scalar_select %p122, %s123, %s124
    %p128 = pneg %p122
    %p129 = scmp.eq.s32.totalorder %s12, 3
    %p130 = por %p128, %p129
    %p131 = scmp.ne.s32.totalorder %s123, %s126
    %p132 = scmp.eq.s32.totalorder %s12, 0
    %p133 = por %p131, %p132
    %p134 = scmp.ne.s32.totalorder %s123, %s126
    %p135 = scmp.eq.s32.totalorder %s17, 3
    %p136 = por %p134, %p135
    %p137 = scmp.ne.s32.totalorder %s126, %s127
    %p138 = scmp.eq.s32.totalorder %s17, 0
    %p139 = por %p137, %p138
    %p140 = scmp.ne.s32.totalorder %s126, %s127
    %p141 = scmp.eq.s32.totalorder %s18, 3
    %p142 = por %p140, %p141
    %p144 = scmp.ne.s32.totalorder %s127, %s143
    %p145 = scmp.eq.s32.totalorder %s18, 0
    %p146 = por %p144, %p145
    %s147 = ssub.s32 %s19, %s38
    %p148 = scmp.eq.s32.totalorder %s147, 0
    %s150 = sadd.s32 %s149, 1
    %s151 = scalar_select %p148, %s149, %s150
    %p154 = pneg %p148
    %p155 = scmp.eq.s32.totalorder %s12, 3
    %p156 = por %p154, %p155
    %p157 = scmp.ne.s32.totalorder %s149, %s152
    %p158 = scmp.eq.s32.totalorder %s12, 0
    %p159 = por %p157, %p158
    %p160 = scmp.ne.s32.totalorder %s149, %s152
    %p161 = scmp.eq.s32.totalorder %s17, 3
    %p162 = por %p160, %p161
    %p163 = scmp.ne.s32.totalorder %s152, %s153
    %p164 = scmp.eq.s32.totalorder %s17, 0
    %p165 = por %p163, %p164
    %p166 = scmp.ne.s32.totalorder %s152, %s153
    %p167 = scmp.eq.s32.totalorder %s18, 3
    %p168 = por %p166, %p167
    %p170 = scmp.ne.s32.totalorder %s153, %s169
    %p171 = scmp.eq.s32.totalorder %s18, 0
    %p172 = por %p170, %p171
    %s173 = ssub.s32 %s19, %s38
    %p174 = scmp.eq.s32.totalorder %s173, 0
    %s176 = sadd.s32 %s175, 1
    %s177 = scalar_select %p174, %s175, %s176
    %p180 = pneg %p174
    %p181 = scmp.eq.s32.totalorder %s12, 3
    %p182 = por %p180, %p181
    %p183 = scmp.ne.s32.totalorder %s175, %s178
    %p184 = scmp.eq.s32.totalorder %s12, 0
    %p185 = por %p183, %p184
    %p186 = scmp.ne.s32.totalorder %s175, %s178
    %p187 = scmp.eq.s32.totalorder %s17, 3
    %p188 = por %p186, %p187
    %p189 = scmp.ne.s32.totalorder %s178, %s179
    %p190 = scmp.eq.s32.totalorder %s17, 0
    %p191 = por %p189, %p190
    %p192 = scmp.ne.s32.totalorder %s178, %s179
    %p193 = scmp.eq.s32.totalorder %s18, 3
    %p194 = por %p192, %p193
    %p196 = scmp.ne.s32.totalorder %s179, %s195
    %p197 = scmp.eq.s32.totalorder %s18, 0
    %p198 = por %p196, %p197
    %p199 = scmp.le.s32.totalorder 1, %s12
    %p200 = scmp.lt.s32.totalorder %s12, 5
    %p201 = pnand %p199, %p200
    %p202 = pneg %p201
    // Predicated region
    $region9: #{supervised_contrastive_loss.3} parent=5 // pred_check
      _
    $region10: #{supervised_contrastive_loss.3} parent=5 // pred_check_branch
      %204 = sbr.rel (%p201) target = $region12
    $region11: #{supervised_contrastive_loss.3} parent=5 // pred_region
      %s205 = ssub.s32 %s12, 1
      // Predicated region
      $region13: #{supervised_contrastive_loss.3} parent=11 // pred_check
        %p206 = pneg %p139
      $region14: #{supervised_contrastive_loss.3} parent=11 // pred_check_branch
        %208 = sbr.rel (%p206) target = $region16
      $region15: #{supervised_contrastive_loss.3} parent=11 // pred_region
        %s209 = smul.u32 2, %s24
        %p210 = scmp.lt.s32.totalorder %s209, 1
        %s211 = scalar_select %p210, %s209, 1
        %s212 = scalar_lea.vmem %s3, %s211
        %s213 = smul.u32 2, %s24
      $region16: #{supervised_contrastive_loss.3} parent=11 // pred_fallthru
        _
    $region12: #{supervised_contrastive_loss.3} parent=5 // pred_fallthru
      _
    %p214 = scmp.lt.s32.totalorder %s12, 4
    // Predicated region
    $region17: #{supervised_contrastive_loss.3} parent=5 // pred_check
      %p215 = pneg %p214
    $region18: #{supervised_contrastive_loss.3} parent=5 // pred_check_branch
      %217 = sbr.rel (%p215) target = $region20
    $region19: #{supervised_contrastive_loss.3} parent=5 // pred_region
      // Predicated region
      $region21: #{supervised_contrastive_loss.3} parent=19 // pred_check
        %p218 = pneg %p51
      $region22: #{supervised_contrastive_loss.3} parent=19 // pred_check_branch
        %220 = sbr.rel (%p218) target = $region24
      $region23: #{supervised_contrastive_loss.3} parent=19 // pred_region
        %s221 = smul.u32 16, %s19
        %p222 = scmp.lt.s32.totalorder %s221, 31
        %s223 = scalar_select %p222, %s221, 31
        %s224 = smul.addr %s223, 4
        %s225 = scalar_lea.vmem %s0, %s224
        %s226 = smul.u32 16, %s19
      $region24: #{supervised_contrastive_loss.3} parent=19 // pred_fallthru
        _
      // Predicated region
      $region25: #{supervised_contrastive_loss.3} parent=19 // pred_check
        %p227 = pneg %p81
      $region26: #{supervised_contrastive_loss.3} parent=19 // pred_check_branch
        %229 = sbr.rel (%p227) target = $region28
      $region27: #{supervised_contrastive_loss.3} parent=19 // pred_region
        %s230 = ssub.s32 1, %s20
        %s231 = smul.u32 %s21, %s230
        %s232 = smul.u32 32, %s231
        %p233 = scmp.lt.s32.totalorder %s232, 31
        %s234 = scalar_select %p233, %s232, 31
        %s235 = smul.addr %s234, 4
        %s236 = scalar_lea.vmem %s1, %s235
        %s237 = ssub.s32 1, %s20
        %s238 = smul.u32 %s21, %s237
        %s239 = smul.u32 32, %s238
      $region28: #{supervised_contrastive_loss.3} parent=19 // pred_fallthru
        _
      // Predicated region
      $region29: #{supervised_contrastive_loss.3} parent=19 // pred_check
        %p240 = pneg %p107
      $region30: #{supervised_contrastive_loss.3} parent=19 // pred_check_branch
        %242 = sbr.rel (%p240) target = $region32
      $region31: #{supervised_contrastive_loss.3} parent=19 // pred_region
        %s243 = smul.u32 16, %s19
        %p244 = scmp.lt.s32.totalorder %s243, 31
        %s245 = scalar_select %p244, %s243, 31
        %s246 = smul.addr %s245, 8
        %s247 = scalar_lea.vmem %s2, %s246
        %s248 = smul.u32 16, %s19
      $region32: #{supervised_contrastive_loss.3} parent=19 // pred_fallthru
        _
    $region20: #{supervised_contrastive_loss.3} parent=5 // pred_fallthru
      _
    %p249 = scmp.le.s32.totalorder 1, %s12
    %p250 = scmp.lt.s32.totalorder %s12, 5
    %p251 = pnand %p249, %p250
    %p252 = pneg %p251
    // Predicated region
    $region33: #{supervised_contrastive_loss.3} parent=5 // pred_check
      _
    $region34: #{supervised_contrastive_loss.3} parent=5 // pred_check_branch
      %254 = sbr.rel (%p251) target = $region36
    $region35: #{supervised_contrastive_loss.3} parent=5 // pred_region
      %s255 = ssub.s32 %s12, 1
      %s256 = smul.u32 16, %s22
      %p257 = scmp.lt.s32.totalorder %s256, 31
      %s258 = scalar_select %p257, %s256, 31
      %s259 = smul.addr %s258, 4
      %s260 = scalar_lea.vmem %s0, %s259
      %p261 = pneg %p57
      %p262 = pneg %p54
      %s263 = ssub.s32 1, %s23
      %s264 = smul.u32 %s24, %s263
      %s265 = smul.u32 32, %s264
      %p266 = scmp.lt.s32.totalorder %s265, 31
      %s267 = scalar_select %p266, %s265, 31
      %s268 = smul.addr %s267, 4
      %s269 = scalar_lea.vmem %s1, %s268
      %p270 = pneg %p87
      %p271 = pneg %p84
      %s272 = smul.u32 16, %s22
      %p273 = scmp.lt.s32.totalorder %s272, 31
      %s274 = scalar_select %p273, %s272, 31
      %s275 = smul.addr %s274, 8
      %s276 = scalar_lea.vmem %s2, %s275
      %p277 = pneg %p113
      %p278 = pneg %p110
      %s279 = smul.u32 2, %s24
      %p280 = scmp.lt.s32.totalorder %s279, 1
      %s281 = scalar_select %p280, %s279, 1
      %s282 = scalar_lea.vmem %s3, %s281
      %p283 = pneg %p139
      %p284 = pneg %p136
      %p285 = pneg %p165
      %p286 = pneg %p162
      %s287 = smul.u32 16, %s22
      %p288 = scmp.lt.s32.totalorder %s287, 31
      %s289 = scalar_select %p288, %s287, 31
      %s290 = smul.addr %s289, 8
      %s291 = scalar_lea.vmem %s4, %s290
      %p292 = pneg %p191
      %p293 = pneg %p188
      %s294 = smul.u32 16, %s22
      %p295 = scmp.lt.s32.totalorder %s294, 31
      %s296 = scalar_select %p295, %s294, 31
      %s297 = smul.addr %s296, 8
      %s298 = scalar_lea.vmem %s5, %s297
      %s299 = smul.u32 16, %s22
      %p300 = scmp.lt.s32.totalorder %s299, 31
      %s301 = scalar_select %p300, %s299, 31
      %s302 = smul.addr %s301, 4
      %s303 = scalar_lea.vmem %s0, %s302
      %s304 = smul.u32 16, %s22
      %s305 = ssub.s32 1, %s23
      %s306 = smul.u32 %s24, %s305
      %s307 = smul.u32 32, %s306
      %p308 = scmp.lt.s32.totalorder %s307, 31
      %s309 = scalar_select %p308, %s307, 31
      %s310 = smul.addr %s309, 4
      %s311 = scalar_lea.vmem %s1, %s310
      %s312 = ssub.s32 1, %s23
      %s313 = smul.u32 %s24, %s312
      %s314 = smul.u32 32, %s313
      %s315 = smul.u32 16, %s22
      %p316 = scmp.lt.s32.totalorder %s315, 31
      %s317 = scalar_select %p316, %s315, 31
      %s318 = smul.addr %s317, 8
      %s319 = scalar_lea.vmem %s2, %s318
      %s320 = smul.u32 16, %s22
      %s321 = smul.u32 2, %s24
      %p322 = scmp.lt.s32.totalorder %s321, 1
      %s323 = scalar_select %p322, %s321, 1
      %s324 = scalar_lea.vmem %s3, %s323
      %s325 = smul.u32 2, %s24
      %s326 = smul.u32 16, %s22
      %p327 = scmp.lt.s32.totalorder %s326, 31
      %s328 = scalar_select %p327, %s326, 31
      %s329 = smul.addr %s328, 8
      %s330 = scalar_lea.vmem %s4, %s329
      %s331 = smul.u32 16, %s22
      %s332 = smul.u32 16, %s22
      %p333 = scmp.lt.s32.totalorder %s332, 31
      %s334 = scalar_select %p333, %s332, 31
      %s335 = smul.addr %s334, 8
      %s336 = scalar_lea.vmem %s5, %s335
      %s337 = smul.u32 16, %s22
      %v339 = vld [vmem:[%s319] sm:$0xff]
      %v340 = vld [vmem:[%s319 + $0x8] sm:$0xff]
      %v341 = vld [vmem:[%s319 + $0x10] sm:$0xff]
      %v342 = vld [vmem:[%s319 + $0x18] sm:$0xff]
      %v343 = vld [vmem:[%s319 + $0x20] sm:$0xff]
      %v344 = vld [vmem:[%s319 + $0x28] sm:$0xff]
      %v345 = vld [vmem:[%s319 + $0x30] sm:$0xff]
      %v346 = vld [vmem:[%s319 + $0x38] sm:$0xff]
      %v347 = vld [vmem:[%s319 + $0x40] sm:$0xff]
      %v348 = vld [vmem:[%s319 + $0x48] sm:$0xff]
      %v349 = vld [vmem:[%s319 + $0x50] sm:$0xff]
      %v350 = vld [vmem:[%s319 + $0x58] sm:$0xff]
      %v351 = vld [vmem:[%s319 + $0x60] sm:$0xff]
      %v352 = vld [vmem:[%s319 + $0x68] sm:$0xff]
      %v353 = vld [vmem:[%s319 + $0x70] sm:$0xff]
      %v354 = vld [vmem:[%s319 + $0x78] sm:$0xff]
      %v355 = vld [vmem:[%s324] sm:$0x3]
      %356 = vset.pattern.permute.xlu0 0
      %357 = vperm.xlu0 %356, %v339
      %v358 = vpop.permute.xlu0 %357
      %359 = vset.pattern.permute.xlu0 0
      %360 = vperm.xlu0 %359, %v340
      %v361 = vpop.permute.xlu0 %360
      %362 = vset.pattern.permute.xlu0 0
      %363 = vperm.xlu0 %362, %v341
      %v364 = vpop.permute.xlu0 %363
      %365 = vset.pattern.permute.xlu0 0
      %366 = vperm.xlu0 %365, %v342
      %v367 = vpop.permute.xlu0 %366
      %368 = vset.pattern.permute.xlu0 0
      %369 = vperm.xlu0 %368, %v343
      %v370 = vpop.permute.xlu0 %369
      %371 = vset.pattern.permute.xlu0 0
      %372 = vperm.xlu0 %371, %v344
      %v373 = vpop.permute.xlu0 %372
      %374 = vset.pattern.permute.xlu0 0
      %375 = vperm.xlu0 %374, %v345
      %v376 = vpop.permute.xlu0 %375
      %377 = vset.pattern.permute.xlu0 0
      %378 = vperm.xlu0 %377, %v346
      %v379 = vpop.permute.xlu0 %378
      %380 = vset.pattern.permute.xlu0 0
      %381 = vperm.xlu0 %380, %v347
      %v382 = vpop.permute.xlu0 %381
      %383 = vset.pattern.permute.xlu0 0
      %384 = vperm.xlu0 %383, %v348
      %v385 = vpop.permute.xlu0 %384
      %386 = vset.pattern.permute.xlu0 0
      %387 = vperm.xlu0 %386, %v349
      %v388 = vpop.permute.xlu0 %387
      %389 = vset.pattern.permute.xlu0 0
      %390 = vperm.xlu0 %389, %v350
      %v391 = vpop.permute.xlu0 %390
      %392 = vset.pattern.permute.xlu0 0
      %393 = vperm.xlu0 %392, %v351
      %v394 = vpop.permute.xlu0 %393
      %395 = vset.pattern.permute.xlu0 0
      %396 = vperm.xlu0 %395, %v352
      %v397 = vpop.permute.xlu0 %396
      %398 = vset.pattern.permute.xlu0 0
      %399 = vperm.xlu0 %398, %v353
      %v400 = vpop.permute.xlu0 %399
      %401 = vset.pattern.permute.xlu0 0
      %402 = vperm.xlu0 %401, %v354
      %v403 = vpop.permute.xlu0 %402
      %v404 = vlaneseq
      %v405 = vshrl.u32 %v404, 7
      %v406 = vsub.s32 0, %v405
      %v407 = vrot.slane %v355, %v406
      %v408 = vlaneseq
      %v409 = vshrl.u32 %v408, 7
      %v410 = vsub.s32 1, %v409
      %v411 = vrot.slane %v355, %v410
      %vm412 = vcmp.eq.s32.totalorder %v358, %v407
      %vm413 = vcmp.eq.s32.totalorder %v358, %v411
      %vm414 = vcmp.eq.s32.totalorder %v361, %v407
      %vm415 = vcmp.eq.s32.totalorder %v361, %v411
      %vm416 = vcmp.eq.s32.totalorder %v364, %v407
      %vm417 = vcmp.eq.s32.totalorder %v364, %v411
      %vm418 = vcmp.eq.s32.totalorder %v367, %v407
      %vm419 = vcmp.eq.s32.totalorder %v367, %v411
      %vm420 = vcmp.eq.s32.totalorder %v370, %v407
      %vm421 = vcmp.eq.s32.totalorder %v370, %v411
      %vm422 = vcmp.eq.s32.totalorder %v373, %v407
      %vm423 = vcmp.eq.s32.totalorder %v373, %v411
      %vm424 = vcmp.eq.s32.totalorder %v376, %v407
      %vm425 = vcmp.eq.s32.totalorder %v376, %v411
      %vm426 = vcmp.eq.s32.totalorder %v379, %v407
      %vm427 = vcmp.eq.s32.totalorder %v379, %v411
      %vm428 = vcmp.eq.s32.totalorder %v382, %v407
      %vm429 = vcmp.eq.s32.totalorder %v382, %v411
      %vm430 = vcmp.eq.s32.totalorder %v385, %v407
      %vm431 = vcmp.eq.s32.totalorder %v385, %v411
      %vm432 = vcmp.eq.s32.totalorder %v388, %v407
      %vm433 = vcmp.eq.s32.totalorder %v388, %v411
      %vm434 = vcmp.eq.s32.totalorder %v391, %v407
      %vm435 = vcmp.eq.s32.totalorder %v391, %v411
      %vm436 = vcmp.eq.s32.totalorder %v394, %v407
      %vm437 = vcmp.eq.s32.totalorder %v394, %v411
      %vm438 = vcmp.eq.s32.totalorder %v397, %v407
      %vm439 = vcmp.eq.s32.totalorder %v397, %v411
      %vm440 = vcmp.eq.s32.totalorder %v400, %v407
      %vm441 = vcmp.eq.s32.totalorder %v400, %v411
      %vm442 = vcmp.eq.s32.totalorder %v403, %v407
      %vm443 = vcmp.eq.s32.totalorder %v403, %v411
      %s444 = smul.u32 %s22, 128
      %v445 = vlaneseq
      %v446 = vshrl.u32 %v445, 7
      %v447 = vadd.s32 %v446, 8
      %v448 = vadd.s32 %v446, 16
      %v449 = vadd.s32 %v446, 24
      %v450 = vadd.s32 %v446, 32
      %v451 = vadd.s32 %v446, 40
      %v452 = vadd.s32 %v446, 48
      %v453 = vadd.s32 %v446, 56
      %v454 = vadd.s32 %v446, 64
      %v455 = vadd.s32 %v446, 72
      %v456 = vadd.s32 %v446, 80
      %v457 = vadd.s32 %v446, 88
      %v458 = vadd.s32 %v446, 96
      %v459 = vadd.s32 %v446, 104
      %v460 = vadd.s32 %v446, 112
      %v461 = vadd.s32 %v446, 120
      %v462 = vstv %s444
      %v463 = vadd.s32 %v462, %v446
      %v464 = vadd.s32 %v462, %v447
      %v465 = vadd.s32 %v462, %v448
      %v466 = vadd.s32 %v462, %v449
      %v467 = vadd.s32 %v462, %v450
      %v468 = vadd.s32 %v462, %v451
      %v469 = vadd.s32 %v462, %v452
      %v470 = vadd.s32 %v462, %v453
      %v471 = vadd.s32 %v462, %v454
      %v472 = vadd.s32 %v462, %v455
      %v473 = vadd.s32 %v462, %v456
      %v474 = vadd.s32 %v462, %v457
      %v475 = vadd.s32 %v462, %v458
      %v476 = vadd.s32 %v462, %v459
      %v477 = vadd.s32 %v462, %v460
      %v478 = vadd.s32 %v462, %v461
      %s479 = smul.u32 %s24, 256
      %v480 = vlaneseq
      %v481 = vand.u32 %v480, 127
      %v482 = vadd.s32 %v481, 128
      %v483 = vstv %s479
      %v484 = vadd.s32 %v483, %v481
      %v485 = vadd.s32 %v483, %v482
      %vm486 = vcmp.lt.s32.totalorder %v463, 48
      %vm487 = vcmp.lt.s32.totalorder %v464, 48
      %vm488 = vcmp.lt.s32.totalorder %v465, 48
      %vm489 = vcmp.lt.s32.totalorder %v466, 48
      %vm490 = vcmp.lt.s32.totalorder %v467, 48
      %vm491 = vcmp.lt.s32.totalorder %v468, 48
      %vm492 = vcmp.lt.s32.totalorder %v469, 48
      %vm493 = vcmp.lt.s32.totalorder %v470, 48
      %vm494 = vcmp.lt.s32.totalorder %v471, 48
      %vm495 = vcmp.lt.s32.totalorder %v472, 48
      %vm496 = vcmp.lt.s32.totalorder %v473, 48
      %vm497 = vcmp.lt.s32.totalorder %v474, 48
      %vm498 = vcmp.lt.s32.totalorder %v475, 48
      %vm499 = vcmp.lt.s32.totalorder %v476, 48
      %vm500 = vcmp.lt.s32.totalorder %v477, 48
      %vm501 = vcmp.lt.s32.totalorder %v478, 48
      %vm502 = vcmp.lt.s32.totalorder %v484, 48
      %vm503 = vcmp.lt.s32.totalorder %v485, 48
      %p504 = scmp.eq.s32.totalorder %s23, 0
      %p505 = scmp.eq.s32.totalorder %s24, 0
      %p506 = pnand %p504, %p505
      %p507 = pneg %p506
      // Predicated region
      $region37: #{supervised_contrastive_loss.3} parent=35 // pred_check
        _
      $region38: #{supervised_contrastive_loss.3} parent=35 // pred_check_branch
        %509 = sbr.rel (%p506) target = $region40
      $region39: #{supervised_contrastive_loss.3} parent=35 // pred_region
        %vm510 = vcmask 7168
        %511 = vst.msk [vmem:[#allocation3] sm:$0xff] %vm510, 0.0
        %512 = vst.msk [vmem:[#allocation3 + $0x8] sm:$0xff] %vm510, 0.0
        %513 = vst.msk [vmem:[#allocation3 + $0x10] sm:$0xff] %vm510, 0.0
        %514 = vst.msk [vmem:[#allocation3 + $0x18] sm:$0xff] %vm510, 0.0
        %515 = vst.msk [vmem:[#allocation3 + $0x20] sm:$0xff] %vm510, 0.0
        %516 = vst.msk [vmem:[#allocation3 + $0x28] sm:$0xff] %vm510, 0.0
        %517 = vst.msk [vmem:[#allocation3 + $0x30] sm:$0xff] %vm510, 0.0
        %518 = vst.msk [vmem:[#allocation3 + $0x38] sm:$0xff] %vm510, 0.0
        %519 = vst.msk [vmem:[#allocation3 + $0x40] sm:$0xff] %vm510, 0.0
        %520 = vst.msk [vmem:[#allocation3 + $0x48] sm:$0xff] %vm510, 0.0
        %521 = vst.msk [vmem:[#allocation3 + $0x50] sm:$0xff] %vm510, 0.0
        %522 = vst.msk [vmem:[#allocation3 + $0x58] sm:$0xff] %vm510, 0.0
        %523 = vst.msk [vmem:[#allocation3 + $0x60] sm:$0xff] %vm510, 0.0
        %524 = vst.msk [vmem:[#allocation3 + $0x68] sm:$0xff] %vm510, 0.0
        %525 = vst.msk [vmem:[#allocation3 + $0x70] sm:$0xff] %vm510, 0.0
        %526 = vst.msk [vmem:[#allocation3 + $0x78] sm:$0xff] %vm510, 0.0
        %527 = vst.msk [vmem:[#allocation4] sm:$0xff] %vm510, 0.0
        %528 = vst.msk [vmem:[#allocation4 + $0x8] sm:$0xff] %vm510, 0.0
        %529 = vst.msk [vmem:[#allocation4 + $0x10] sm:$0xff] %vm510, 0.0
        %530 = vst.msk [vmem:[#allocation4 + $0x18] sm:$0xff] %vm510, 0.0
        %531 = vst.msk [vmem:[#allocation4 + $0x20] sm:$0xff] %vm510, 0.0
        %532 = vst.msk [vmem:[#allocation4 + $0x28] sm:$0xff] %vm510, 0.0
        %533 = vst.msk [vmem:[#allocation4 + $0x30] sm:$0xff] %vm510, 0.0
        %534 = vst.msk [vmem:[#allocation4 + $0x38] sm:$0xff] %vm510, 0.0
        %535 = vst.msk [vmem:[#allocation4 + $0x40] sm:$0xff] %vm510, 0.0
        %536 = vst.msk [vmem:[#allocation4 + $0x48] sm:$0xff] %vm510, 0.0
        %537 = vst.msk [vmem:[#allocation4 + $0x50] sm:$0xff] %vm510, 0.0
        %538 = vst.msk [vmem:[#allocation4 + $0x58] sm:$0xff] %vm510, 0.0
        %539 = vst.msk [vmem:[#allocation4 + $0x60] sm:$0xff] %vm510, 0.0
        %540 = vst.msk [vmem:[#allocation4 + $0x68] sm:$0xff] %vm510, 0.0
        %541 = vst.msk [vmem:[#allocation4 + $0x70] sm:$0xff] %vm510, 0.0
        %542 = vst.msk [vmem:[#allocation4 + $0x78] sm:$0xff] %vm510, 0.0
        %543 = vst.msk [vmem:[#allocation5] sm:$0xff] %vm510, 0.0
        %544 = vst.msk [vmem:[#allocation5 + $0x8] sm:$0xff] %vm510, 0.0
        %545 = vst.msk [vmem:[#allocation5 + $0x10] sm:$0xff] %vm510, 0.0
        %546 = vst.msk [vmem:[#allocation5 + $0x18] sm:$0xff] %vm510, 0.0
        %547 = vst.msk [vmem:[#allocation5 + $0x20] sm:$0xff] %vm510, 0.0
        %548 = vst.msk [vmem:[#allocation5 + $0x28] sm:$0xff] %vm510, 0.0
        %549 = vst.msk [vmem:[#allocation5 + $0x30] sm:$0xff] %vm510, 0.0
        %550 = vst.msk [vmem:[#allocation5 + $0x38] sm:$0xff] %vm510, 0.0
        %551 = vst.msk [vmem:[#allocation5 + $0x40] sm:$0xff] %vm510, 0.0
        %552 = vst.msk [vmem:[#allocation5 + $0x48] sm:$0xff] %vm510, 0.0
        %553 = vst.msk [vmem:[#allocation5 + $0x50] sm:$0xff] %vm510, 0.0
        %554 = vst.msk [vmem:[#allocation5 + $0x58] sm:$0xff] %vm510, 0.0
        %555 = vst.msk [vmem:[#allocation5 + $0x60] sm:$0xff] %vm510, 0.0
        %556 = vst.msk [vmem:[#allocation5 + $0x68] sm:$0xff] %vm510, 0.0
        %557 = vst.msk [vmem:[#allocation5 + $0x70] sm:$0xff] %vm510, 0.0
        %558 = vst.msk [vmem:[#allocation5 + $0x78] sm:$0xff] %vm510, 0.0
      $region40: #{supervised_contrastive_loss.3} parent=35 // pred_fallthru
        _
      // Predicated region
      $region41: #{supervised_contrastive_loss.3} parent=35 // pred_check
        %p559 = pneg %p504
      $region42: #{supervised_contrastive_loss.3} parent=35 // pred_check_branch
        %561 = sbr.rel (%p559) target = $region44
      $region43: #{supervised_contrastive_loss.3} parent=35 // pred_region
        %v562 = vld [vmem:[%s303] sm:$0xf]
        %v563 = vld [vmem:[%s303 + $0x4] sm:$0xf]
        %v564 = vld [vmem:[%s303 + $0x8] sm:$0xf]
        %v565 = vld [vmem:[%s303 + $0xc] sm:$0xf]
        %v566 = vld [vmem:[%s303 + $0x10] sm:$0xf]
        %v567 = vld [vmem:[%s303 + $0x14] sm:$0xf]
        %v568 = vld [vmem:[%s303 + $0x18] sm:$0xf]
        %v569 = vld [vmem:[%s303 + $0x1c] sm:$0xf]
        %v570 = vld [vmem:[%s303 + $0x20] sm:$0xf]
        %v571 = vld [vmem:[%s303 + $0x24] sm:$0xf]
        %v572 = vld [vmem:[%s303 + $0x28] sm:$0xf]
        %v573 = vld [vmem:[%s303 + $0x2c] sm:$0xf]
        %v574 = vld [vmem:[%s303 + $0x30] sm:$0xf]
        %v575 = vld [vmem:[%s303 + $0x34] sm:$0xf]
        %v576 = vld [vmem:[%s303 + $0x38] sm:$0xf]
        %v577 = vld [vmem:[%s303 + $0x3c] sm:$0xf]
        %v578 = vld [vmem:[%s311] sm:$0xf]
        %v579 = vld [vmem:[%s311 + $0x4] sm:$0xf]
        %v580 = vld [vmem:[%s311 + $0x8] sm:$0xf]
        %v581 = vld [vmem:[%s311 + $0xc] sm:$0xf]
        %v582 = vld [vmem:[%s311 + $0x10] sm:$0xf]
        %v583 = vld [vmem:[%s311 + $0x14] sm:$0xf]
        %v584 = vld [vmem:[%s311 + $0x18] sm:$0xf]
        %v585 = vld [vmem:[%s311 + $0x1c] sm:$0xf]
        %v586 = vld [vmem:[%s311 + $0x20] sm:$0xf]
        %v587 = vld [vmem:[%s311 + $0x24] sm:$0xf]
        %v588 = vld [vmem:[%s311 + $0x28] sm:$0xf]
        %v589 = vld [vmem:[%s311 + $0x2c] sm:$0xf]
        %v590 = vld [vmem:[%s311 + $0x30] sm:$0xf]
        %v591 = vld [vmem:[%s311 + $0x34] sm:$0xf]
        %v592 = vld [vmem:[%s311 + $0x38] sm:$0xf]
        %v593 = vld [vmem:[%s311 + $0x3c] sm:$0xf]
        %v594 = vld [vmem:[%s311 + $0x40] sm:$0xf]
        %v595 = vld [vmem:[%s311 + $0x44] sm:$0xf]
        %v596 = vld [vmem:[%s311 + $0x48] sm:$0xf]
        %v597 = vld [vmem:[%s311 + $0x4c] sm:$0xf]
        %v598 = vld [vmem:[%s311 + $0x50] sm:$0xf]
        %v599 = vld [vmem:[%s311 + $0x54] sm:$0xf]
        %v600 = vld [vmem:[%s311 + $0x58] sm:$0xf]
        %v601 = vld [vmem:[%s311 + $0x5c] sm:$0xf]
        %v602 = vld [vmem:[%s311 + $0x60] sm:$0xf]
        %v603 = vld [vmem:[%s311 + $0x64] sm:$0xf]
        %v604 = vld [vmem:[%s311 + $0x68] sm:$0xf]
        %v605 = vld [vmem:[%s311 + $0x6c] sm:$0xf]
        %v606 = vld [vmem:[%s311 + $0x70] sm:$0xf]
        %v607 = vld [vmem:[%s311 + $0x74] sm:$0xf]
        %v608 = vld [vmem:[%s311 + $0x78] sm:$0xf]
        %v609 = vld [vmem:[%s311 + $0x7c] sm:$0xf]
        %v626 = vunpack.c.l.b16 %v562
        %v627 = vunpack.c.l.b16 %v563
        %v628 = vunpack.c.l.b16 %v564
        %v629 = vunpack.c.l.b16 %v565
        %v630 = vunpack.c.l.b16 %v566
        %v631 = vunpack.c.l.b16 %v567
        %v632 = vunpack.c.l.b16 %v568
        %v633 = vunpack.c.l.b16 %v569
        %v634 = vunpack.c.l.b16 %v570
        %v635 = vunpack.c.l.b16 %v571
        %v636 = vunpack.c.l.b16 %v572
        %v637 = vunpack.c.l.b16 %v573
        %v638 = vunpack.c.l.b16 %v574
        %v639 = vunpack.c.l.b16 %v575
        %v640 = vunpack.c.l.b16 %v576
        %v641 = vunpack.c.l.b16 %v577
        %v642 = vpack.c.b16 %v627, %v626
        %v643 = vpack.c.b16 %v629, %v628
        %v644 = vpack.c.b16 %v631, %v630
        %v645 = vpack.c.b16 %v633, %v632
        %v646 = vpack.c.b16 %v635, %v634
        %v647 = vpack.c.b16 %v637, %v636
        %v648 = vpack.c.b16 %v639, %v638
        %v649 = vpack.c.b16 %v641, %v640
        %v690 = vunpack.c.l.b16 %v578
        %v691 = vunpack.c.l.b16 %v579
        %v692 = vunpack.c.l.b16 %v580
        %v693 = vunpack.c.l.b16 %v581
        %v694 = vunpack.c.l.b16 %v582
        %v695 = vunpack.c.l.b16 %v583
        %v696 = vunpack.c.l.b16 %v584
        %v697 = vunpack.c.l.b16 %v585
        %v698 = vunpack.c.l.b16 %v586
        %v699 = vunpack.c.l.b16 %v587
        %v700 = vunpack.c.l.b16 %v588
        %v701 = vunpack.c.l.b16 %v589
        %v702 = vunpack.c.l.b16 %v590
        %v703 = vunpack.c.l.b16 %v591
        %v704 = vunpack.c.l.b16 %v592
        %v705 = vunpack.c.l.b16 %v593
        %v706 = vunpack.c.l.b16 %v594
        %v707 = vunpack.c.l.b16 %v595
        %v708 = vunpack.c.l.b16 %v596
        %v709 = vunpack.c.l.b16 %v597
        %v710 = vunpack.c.l.b16 %v598
        %v711 = vunpack.c.l.b16 %v599
        %v712 = vunpack.c.l.b16 %v600
        %v713 = vunpack.c.l.b16 %v601
        %v714 = vunpack.c.l.b16 %v602
        %v715 = vunpack.c.l.b16 %v603
        %v716 = vunpack.c.l.b16 %v604
        %v717 = vunpack.c.l.b16 %v605
        %v718 = vunpack.c.l.b16 %v606
        %v719 = vunpack.c.l.b16 %v607
        %v720 = vunpack.c.l.b16 %v608
        %v721 = vunpack.c.l.b16 %v609
        %v722 = vpack.c.b16 %v691, %v690
        %v723 = vpack.c.b16 %v693, %v692
        %v724 = vpack.c.b16 %v695, %v694
        %v725 = vpack.c.b16 %v697, %v696
        %v726 = vpack.c.b16 %v699, %v698
        %v727 = vpack.c.b16 %v701, %v700
        %v728 = vpack.c.b16 %v703, %v702
        %v729 = vpack.c.b16 %v705, %v704
        %v730 = vpack.c.b16 %v707, %v706
        %v731 = vpack.c.b16 %v709, %v708
        %v732 = vpack.c.b16 %v711, %v710
        %v733 = vpack.c.b16 %v713, %v712
        %v734 = vpack.c.b16 %v715, %v714
        %v735 = vpack.c.b16 %v717, %v716
        %v736 = vpack.c.b16 %v719, %v718
        %v737 = vpack.c.b16 %v721, %v720
        %754 = vmatprep.subr.bf16.mxu0 0
        %755 = vmatpush1.bf16.xpose.msra.mxu0 %v722
        %756 = vmatprep.subr.bf16.mxu0 0
        %757 = vmatpush1.bf16.xpose.msra.mxu0 %v723
        %758 = vmatprep.subr.bf16.mxu0 0
        %759 = vmatpush1.bf16.xpose.msra.mxu0 %v724
        %760 = vmatprep.subr.bf16.mxu0 0
        %761 = vmatpush1.bf16.xpose.msra.mxu0 %v725
        %762 = vmatprep.subr.bf16.mxu0 0
        %763 = vmatpush1.bf16.xpose.msra.mxu0 %v726
        %764 = vmatprep.subr.bf16.mxu0 0
        %765 = vmatpush1.bf16.xpose.msra.mxu0 %v727
        %766 = vmatprep.subr.bf16.mxu0 0
        %767 = vmatpush1.bf16.xpose.msra.mxu0 %v728
        %768 = vmatprep.subr.bf16.mxu0 0
        %769 = vmatpush1.bf16.xpose.msra.mxu0 %v729
        %770 = vmatprep.subr.bf16.mxu0 0
        %771 = vmatpush1.bf16.xpose.msra.mxu0 %v730
        %772 = vmatprep.subr.bf16.mxu0 0
        %773 = vmatpush1.bf16.xpose.msra.mxu0 %v731
        %774 = vmatprep.subr.bf16.mxu0 0
        %775 = vmatpush1.bf16.xpose.msra.mxu0 %v732
        %776 = vmatprep.subr.bf16.mxu0 0
        %777 = vmatpush1.bf16.xpose.msra.mxu0 %v733
        %778 = vmatprep.subr.bf16.mxu0 0
        %779 = vmatpush1.bf16.xpose.msra.mxu0 %v734
        %780 = vmatprep.subr.bf16.mxu0 0
        %781 = vmatpush1.bf16.xpose.msra.mxu0 %v735
        %782 = vmatprep.subr.bf16.mxu0 0
        %783 = vmatpush1.bf16.xpose.msra.mxu0 %v736
        %784 = vmatprep.subr.bf16.mxu0 0
        %785 = vmatpush1.bf16.xpose.msra.mxu0 %v737
        %786 = vmatprep.mubr.bf16.mxu0 0
        %787 = vmatmul.mubr.bf16.gmra.mrb[0].mxu0 %v642
        %v788 = vpop.f32.mrb[0].mxu0
        %v789 = vadd.f32 0.0, %v788
        %v790 = vpop.f32.mrb[0].mxu0
        %v791 = vadd.f32 0.0, %v790
        %v792 = vpop.f32.mrb[0].mxu0
        %v793 = vadd.f32 0.0, %v792
        %v794 = vpop.f32.mrb[0].mxu0
        %v795 = vadd.f32 0.0, %v794
        %796 = vmatprep.mubr.bf16.mxu0 0
        %797 = vmatmul.mubr.bf16.gmra.mrb[0].mxu0 %v643
        %v798 = vpop.f32.mrb[0].mxu0
        %v799 = vadd.f32 0.0, %v798
        %v800 = vpop.f32.mrb[0].mxu0
        %v801 = vadd.f32 0.0, %v800
        %v802 = vpop.f32.mrb[0].mxu0
        %v803 = vadd.f32 0.0, %v802
        %v804 = vpop.f32.mrb[0].mxu0
        %v805 = vadd.f32 0.0, %v804
        %806 = vmatprep.mubr.bf16.mxu0 0
        %807 = vmatmul.mubr.bf16.gmra.mrb[0].mxu0 %v644
        %v808 = vpop.f32.mrb[0].mxu0
        %v809 = vadd.f32 0.0, %v808
        %v810 = vpop.f32.mrb[0].mxu0
        %v811 = vadd.f32 0.0, %v810
        %v812 = vpop.f32.mrb[0].mxu0
        %v813 = vadd.f32 0.0, %v812
        %v814 = vpop.f32.mrb[0].mxu0
        %v815 = vadd.f32 0.0, %v814
        %816 = vmatprep.mubr.bf16.mxu0 0
        %817 = vmatmul.mubr.bf16.gmra.mrb[0].mxu0 %v645
        %v818 = vpop.f32.mrb[0].mxu0
        %v819 = vadd.f32 0.0, %v818
        %v820 = vpop.f32.mrb[0].mxu0
        %v821 = vadd.f32 0.0, %v820
        %v822 = vpop.f32.mrb[0].mxu0
        %v823 = vadd.f32 0.0, %v822
        %v824 = vpop.f32.mrb[0].mxu0
        %v825 = vadd.f32 0.0, %v824
        %826 = vmatprep.mubr.bf16.mxu0 0
        %827 = vmatmul.mubr.bf16.gmra.mrb[0].mxu0 %v646
        %v828 = vpop.f32.mrb[0].mxu0
        %v829 = vadd.f32 0.0, %v828
        %v830 = vpop.f32.mrb[0].mxu0
        %v831 = vadd.f32 0.0, %v830
        %v832 = vpop.f32.mrb[0].mxu0
        %v833 = vadd.f32 0.0, %v832
        %v834 = vpop.f32.mrb[0].mxu0
        %v835 = vadd.f32 0.0, %v834
        %836 = vmatprep.mubr.bf16.mxu0 0
        %837 = vmatmul.mubr.bf16.gmra.mrb[0].mxu0 %v647
        %v838 = vpop.f32.mrb[0].mxu0
        %v839 = vadd.f32 0.0, %v838
        %v840 = vpop.f32.mrb[0].mxu0
        %v841 = vadd.f32 0.0, %v840
        %v842 = vpop.f32.mrb[0].mxu0
        %v843 = vadd.f32 0.0, %v842
        %v844 = vpop.f32.mrb[0].mxu0
        %v845 = vadd.f32 0.0, %v844
        %846 = vmatprep.mubr.bf16.mxu0 0
        %847 = vmatmul.mubr.bf16.gmra.mrb[0].mxu0 %v648
        %v848 = vpop.f32.mrb[0].mxu0
        %v849 = vadd.f32 0.0, %v848
        %v850 = vpop.f32.mrb[0].mxu0
        %v851 = vadd.f32 0.0, %v850
        %v852 = vpop.f32.mrb[0].mxu0
        %v853 = vadd.f32 0.0, %v852
        %v854 = vpop.f32.mrb[0].mxu0
        %v855 = vadd.f32 0.0, %v854
        %856 = vmatprep.mubr.bf16.mxu0 0
        %857 = vmatmul.mubr.bf16.gmra.mrb[0].mxu0 %v649
        %v858 = vpop.f32.mrb[0].mxu0
        %v859 = vadd.f32 0.0, %v858
        %v860 = vpop.f32.mrb[0].mxu0
        %v861 = vadd.f32 0.0, %v860
        %v862 = vpop.f32.mrb[0].mxu0
        %v863 = vadd.f32 0.0, %v862
        %v864 = vpop.f32.mrb[0].mxu0
        %v865 = vadd.f32 0.0, %v864
        %866 = vdwg.mxu0
        %v867 = vsub.f32 %v789, 10.0
        %v868 = vsub.f32 %v791, 10.0
        %v869 = vsub.f32 %v793, 10.0
        %v870 = vsub.f32 %v795, 10.0
        %v871 = vsub.f32 %v799, 10.0
        %v872 = vsub.f32 %v801, 10.0
        %v873 = vsub.f32 %v803, 10.0
        %v874 = vsub.f32 %v805, 10.0
        %v875 = vsub.f32 %v809, 10.0
        %v876 = vsub.f32 %v811, 10.0
        %v877 = vsub.f32 %v813, 10.0
        %v878 = vsub.f32 %v815, 10.0
        %v879 = vsub.f32 %v819, 10.0
        %v880 = vsub.f32 %v821, 10.0
        %v881 = vsub.f32 %v823, 10.0
        %v882 = vsub.f32 %v825, 10.0
        %v883 = vsub.f32 %v829, 10.0
        %v884 = vsub.f32 %v831, 10.0
        %v885 = vsub.f32 %v833, 10.0
        %v886 = vsub.f32 %v835, 10.0
        %v887 = vsub.f32 %v839, 10.0
        %v888 = vsub.f32 %v841, 10.0
        %v889 = vsub.f32 %v843, 10.0
        %v890 = vsub.f32 %v845, 10.0
        %v891 = vsub.f32 %v849, 10.0
        %v892 = vsub.f32 %v851, 10.0
        %v893 = vsub.f32 %v853, 10.0
        %v894 = vsub.f32 %v855, 10.0
        %v895 = vsub.f32 %v859, 10.0
        %v896 = vsub.f32 %v861, 10.0
        %v897 = vsub.f32 %v863, 10.0
        %v898 = vsub.f32 %v865, 10.0
        %v899 = vmul.f32 %v867, 1.442695
        %v900 = vpow.pop %v899
        %v901 = vmul.f32 %v868, 1.442695
        %v902 = vpow.pop %v901
        %v903 = vmul.f32 %v869, 1.442695
        %v904 = vpow.pop %v903
        %v905 = vmul.f32 %v870, 1.442695
        %v906 = vpow.pop %v905
        %v907 = vmul.f32 %v871, 1.442695
        %v908 = vpow.pop %v907
        %v909 = vmul.f32 %v872, 1.442695
        %v910 = vpow.pop %v909
        %v911 = vmul.f32 %v873, 1.442695
        %v912 = vpow.pop %v911
        %v913 = vmul.f32 %v874, 1.442695
        %v914 = vpow.pop %v913
        %v915 = vmul.f32 %v875, 1.442695
        %v916 = vpow.pop %v915
        %v917 = vmul.f32 %v876, 1.442695
        %v918 = vpow.pop %v917
        %v919 = vmul.f32 %v877, 1.442695
        %v920 = vpow.pop %v919
        %v921 = vmul.f32 %v878, 1.442695
        %v922 = vpow.pop %v921
        %v923 = vmul.f32 %v879, 1.442695
        %v924 = vpow.pop %v923
        %v925 = vmul.f32 %v880, 1.442695
        %v926 = vpow.pop %v925
        %v927 = vmul.f32 %v881, 1.442695
        %v928 = vpow.pop %v927
        %v929 = vmul.f32 %v882, 1.442695
        %v930 = vpow.pop %v929
        %v931 = vmul.f32 %v883, 1.442695
        %v932 = vpow.pop %v931
        %v933 = vmul.f32 %v884, 1.442695
        %v934 = vpow.pop %v933
        %v935 = vmul.f32 %v885, 1.442695
        %v936 = vpow.pop %v935
        %v937 = vmul.f32 %v886, 1.442695
        %v938 = vpow.pop %v937
        %v939 = vmul.f32 %v887, 1.442695
        %v940 = vpow.pop %v939
        %v941 = vmul.f32 %v888, 1.442695
        %v942 = vpow.pop %v941
        %v943 = vmul.f32 %v889, 1.442695
        %v944 = vpow.pop %v943
        %v945 = vmul.f32 %v890, 1.442695
        %v946 = vpow.pop %v945
        %v947 = vmul.f32 %v891, 1.442695
        %v948 = vpow.pop %v947
        %v949 = vmul.f32 %v892, 1.442695
        %v950 = vpow.pop %v949
        %v951 = vmul.f32 %v893, 1.442695
        %v952 = vpow.pop %v951
        %v953 = vmul.f32 %v894, 1.442695
        %v954 = vpow.pop %v953
        %v955 = vmul.f32 %v895, 1.442695
        %v956 = vpow.pop %v955
        %v957 = vmul.f32 %v896, 1.442695
        %v958 = vpow.pop %v957
        %v959 = vmul.f32 %v897, 1.442695
        %v960 = vpow.pop %v959
        %v961 = vmul.f32 %v898, 1.442695
        %v962 = vpow.pop %v961
        %v963 = vadd.f32 %v900, 1e-05
        %v964 = vadd.f32 %v902, 1e-05
        %v965 = vadd.f32 %v904, 1e-05
        %v966 = vadd.f32 %v906, 1e-05
        %v967 = vadd.f32 %v908, 1e-05
        %v968 = vadd.f32 %v910, 1e-05
        %v969 = vadd.f32 %v912, 1e-05
        %v970 = vadd.f32 %v914, 1e-05
        %v971 = vadd.f32 %v916, 1e-05
        %v972 = vadd.f32 %v918, 1e-05
        %v973 = vadd.f32 %v920, 1e-05
        %v974 = vadd.f32 %v922, 1e-05
        %v975 = vadd.f32 %v924, 1e-05
        %v976 = vadd.f32 %v926, 1e-05
        %v977 = vadd.f32 %v928, 1e-05
        %v978 = vadd.f32 %v930, 1e-05
        %v979 = vadd.f32 %v932, 1e-05
        %v980 = vadd.f32 %v934, 1e-05
        %v981 = vadd.f32 %v936, 1e-05
        %v982 = vadd.f32 %v938, 1e-05
        %v983 = vadd.f32 %v940, 1e-05
        %v984 = vadd.f32 %v942, 1e-05
        %v985 = vadd.f32 %v944, 1e-05
        %v986 = vadd.f32 %v946, 1e-05
        %v987 = vadd.f32 %v948, 1e-05
        %v988 = vadd.f32 %v950, 1e-05
        %v989 = vadd.f32 %v952, 1e-05
        %v990 = vadd.f32 %v954, 1e-05
        %v991 = vadd.f32 %v956, 1e-05
        %v992 = vadd.f32 %v958, 1e-05
        %v993 = vadd.f32 %v960, 1e-05
        %v994 = vadd.f32 %v962, 1e-05
        %s995 = smul.u32 %s24, 32
        %s996 = smul.addr %s995, 8
        %s997 = scalar_lea.vmem [#allocation2], %s996
        %998 = vst [vmem:[%s997] sm:$0xff] %v963
        %999 = vst [vmem:[%s997 + $0x8] sm:$0xff] %v964
        %1000 = vst [vmem:[%s997 + $0x10] sm:$0xff] %v965
        %1001 = vst [vmem:[%s997 + $0x18] sm:$0xff] %v966
        %1002 = vst [vmem:[%s997 + $0x20] sm:$0xff] %v967
        %1003 = vst [vmem:[%s997 + $0x28] sm:$0xff] %v968
        %1004 = vst [vmem:[%s997 + $0x30] sm:$0xff] %v969
        %1005 = vst [vmem:[%s997 + $0x38] sm:$0xff] %v970
        %1006 = vst [vmem:[%s997 + $0x40] sm:$0xff] %v971
        %1007 = vst [vmem:[%s997 + $0x48] sm:$0xff] %v972
        %1008 = vst [vmem:[%s997 + $0x50] sm:$0xff] %v973
        %1009 = vst [vmem:[%s997 + $0x58] sm:$0xff] %v974
        %1010 = vst [vmem:[%s997 + $0x60] sm:$0xff] %v975
        %1011 = vst [vmem:[%s997 + $0x68] sm:$0xff] %v976
        %1012 = vst [vmem:[%s997 + $0x70] sm:$0xff] %v977
        %1013 = vst [vmem:[%s997 + $0x78] sm:$0xff] %v978
        %1014 = vst [vmem:[%s997 + $0x80] sm:$0xff] %v979
        %1015 = vst [vmem:[%s997 + $0x88] sm:$0xff] %v980
        %1016 = vst [vmem:[%s997 + $0x90] sm:$0xff] %v981
        %1017 = vst [vmem:[%s997 + $0x98] sm:$0xff] %v982
        %1018 = vst [vmem:[%s997 + $0xa0] sm:$0xff] %v983
        %1019 = vst [vmem:[%s997 + $0xa8] sm:$0xff] %v984
        %1020 = vst [vmem:[%s997 + $0xb0] sm:$0xff] %v985
        %1021 = vst [vmem:[%s997 + $0xb8] sm:$0xff] %v986
        %1022 = vst [vmem:[%s997 + $0xc0] sm:$0xff] %v987
        %1023 = vst [vmem:[%s997 + $0xc8] sm:$0xff] %v988
        %1024 = vst [vmem:[%s997 + $0xd0] sm:$0xff] %v989
        %1025 = vst [vmem:[%s997 + $0xd8] sm:$0xff] %v990
        %1026 = vst [vmem:[%s997 + $0xe0] sm:$0xff] %v991
        %1027 = vst [vmem:[%s997 + $0xe8] sm:$0xff] %v992
        %1028 = vst [vmem:[%s997 + $0xf0] sm:$0xff] %v993
        %1029 = vst [vmem:[%s997 + $0xf8] sm:$0xff] %v994
        %vm1030 = vmxor %vm502, 1
        %vm1031 = vmxor %vm503, 1
        %v1032 = vsel %vm1030, 1, 0
        %v1033 = vsel %vm1031, 1, 0
        %vm1034 = vcmp.eq.s32.totalorder %v1032, 1
        %vm1035 = vcmp.eq.s32.totalorder %v1033, 1
        %vm1036 = vmor %vm412, %vm1034
        %vm1037 = vmor %vm413, %vm1035
        %vm1038 = vmor %vm414, %vm1034
        %vm1039 = vmor %vm415, %vm1035
        %vm1040 = vmor %vm416, %vm1034
        %vm1041 = vmor %vm417, %vm1035
        %vm1042 = vmor %vm418, %vm1034
        %vm1043 = vmor %vm419, %vm1035
        %vm1044 = vmor %vm420, %vm1034
        %vm1045 = vmor %vm421, %vm1035
        %vm1046 = vmor %vm422, %vm1034
        %vm1047 = vmor %vm423, %vm1035
        %vm1048 = vmor %vm424, %vm1034
        %vm1049 = vmor %vm425, %vm1035
        %vm1050 = vmor %vm426, %vm1034
        %vm1051 = vmor %vm427, %vm1035
        %vm1052 = vmor %vm428, %vm1034
        %vm1053 = vmor %vm429, %vm1035
        %vm1054 = vmor %vm430, %vm1034
        %vm1055 = vmor %vm431, %vm1035
        %vm1056 = vmor %vm432, %vm1034
        %vm1057 = vmor %vm433, %vm1035
        %vm1058 = vmor %vm434, %vm1034
        %vm1059 = vmor %vm435, %vm1035
        %vm1060 = vmor %vm436, %vm1034
        %vm1061 = vmor %vm437, %vm1035
        %vm1062 = vmor %vm438, %vm1034
        %vm1063 = vmor %vm439, %vm1035
        %vm1064 = vmor %vm440, %vm1034
        %vm1065 = vmor %vm441, %vm1035
        %vm1066 = vmor %vm442, %vm1034
        %vm1067 = vmor %vm443, %vm1035
        %v1068 = vld [vmem:[#allocation3] sm:$0xff]
        %v1069 = vld [vmem:[#allocation3 + $0x8] sm:$0xff]
        %v1070 = vld [vmem:[#allocation3 + $0x10] sm:$0xff]
        %v1071 = vld [vmem:[#allocation3 + $0x18] sm:$0xff]
        %v1072 = vld [vmem:[#allocation3 + $0x20] sm:$0xff]
        %v1073 = vld [vmem:[#allocation3 + $0x28] sm:$0xff]
        %v1074 = vld [vmem:[#allocation3 + $0x30] sm:$0xff]
        %v1075 = vld [vmem:[#allocation3 + $0x38] sm:$0xff]
        %v1076 = vld [vmem:[#allocation3 + $0x40] sm:$0xff]
        %v1077 = vld [vmem:[#allocation3 + $0x48] sm:$0xff]
        %v1078 = vld [vmem:[#allocation3 + $0x50] sm:$0xff]
        %v1079 = vld [vmem:[#allocation3 + $0x58] sm:$0xff]
        %v1080 = vld [vmem:[#allocation3 + $0x60] sm:$0xff]
        %v1081 = vld [vmem:[#allocation3 + $0x68] sm:$0xff]
        %v1082 = vld [vmem:[#allocation3 + $0x70] sm:$0xff]
        %v1083 = vld [vmem:[#allocation3 + $0x78] sm:$0xff]
        %v1084 = vsel %vm1036, 0.0, %v963
        %v1085 = vsel %vm1037, 0.0, %v964
        %v1086 = vsel %vm1038, 0.0, %v965
        %v1087 = vsel %vm1039, 0.0, %v966
        %v1088 = vsel %vm1040, 0.0, %v967
        %v1089 = vsel %vm1041, 0.0, %v968
        %v1090 = vsel %vm1042, 0.0, %v969
        %v1091 = vsel %vm1043, 0.0, %v970
        %v1092 = vsel %vm1044, 0.0, %v971
        %v1093 = vsel %vm1045, 0.0, %v972
        %v1094 = vsel %vm1046, 0.0, %v973
        %v1095 = vsel %vm1047, 0.0, %v974
        %v1096 = vsel %vm1048, 0.0, %v975
        %v1097 = vsel %vm1049, 0.0, %v976
        %v1098 = vsel %vm1050, 0.0, %v977
        %v1099 = vsel %vm1051, 0.0, %v978
        %v1100 = vsel %vm1052, 0.0, %v979
        %v1101 = vsel %vm1053, 0.0, %v980
        %v1102 = vsel %vm1054, 0.0, %v981
        %v1103 = vsel %vm1055, 0.0, %v982
        %v1104 = vsel %vm1056, 0.0, %v983
        %v1105 = vsel %vm1057, 0.0, %v984
        %v1106 = vsel %vm1058, 0.0, %v985
        %v1107 = vsel %vm1059, 0.0, %v986
        %v1108 = vsel %vm1060, 0.0, %v987
        %v1109 = vsel %vm1061, 0.0, %v988
        %v1110 = vsel %vm1062, 0.0, %v989
        %v1111 = vsel %vm1063, 0.0, %v990
        %v1112 = vsel %vm1064, 0.0, %v991
        %v1113 = vsel %vm1065, 0.0, %v992
        %v1114 = vsel %vm1066, 0.0, %v993
        %v1115 = vsel %vm1067, 0.0, %v994
        %v1116 = vadd.f32 %v1084, %v1085
        %1117 = vadd.xlane.f32.xlu0 %v1116
        %v1118 = vpop.xlane.xlu0 %1117
        %v1119 = vadd.f32 %v1086, %v1087
        %1120 = vadd.xlane.f32.xlu0 %v1119
        %v1121 = vpop.xlane.xlu0 %1120
        %v1122 = vadd.f32 %v1088, %v1089
        %1123 = vadd.xlane.f32.xlu0 %v1122
        %v1124 = vpop.xlane.xlu0 %1123
        %v1125 = vadd.f32 %v1090, %v1091
        %1126 = vadd.xlane.f32.xlu0 %v1125
        %v1127 = vpop.xlane.xlu0 %1126
        %v1128 = vadd.f32 %v1092, %v1093
        %1129 = vadd.xlane.f32.xlu0 %v1128
        %v1130 = vpop.xlane.xlu0 %1129
        %v1131 = vadd.f32 %v1094, %v1095
        %1132 = vadd.xlane.f32.xlu0 %v1131
        %v1133 = vpop.xlane.xlu0 %1132
        %v1134 = vadd.f32 %v1096, %v1097
        %1135 = vadd.xlane.f32.xlu0 %v1134
        %v1136 = vpop.xlane.xlu0 %1135
        %v1137 = vadd.f32 %v1098, %v1099
        %1138 = vadd.xlane.f32.xlu0 %v1137
        %v1139 = vpop.xlane.xlu0 %1138
        %v1140 = vadd.f32 %v1100, %v1101
        %1141 = vadd.xlane.f32.xlu0 %v1140
        %v1142 = vpop.xlane.xlu0 %1141
        %v1143 = vadd.f32 %v1102, %v1103
        %1144 = vadd.xlane.f32.xlu0 %v1143
        %v1145 = vpop.xlane.xlu0 %1144
        %v1146 = vadd.f32 %v1104, %v1105
        %1147 = vadd.xlane.f32.xlu0 %v1146
        %v1148 = vpop.xlane.xlu0 %1147
        %v1149 = vadd.f32 %v1106, %v1107
        %1150 = vadd.xlane.f32.xlu0 %v1149
        %v1151 = vpop.xlane.xlu0 %1150
        %v1152 = vadd.f32 %v1108, %v1109
        %1153 = vadd.xlane.f32.xlu0 %v1152
        %v1154 = vpop.xlane.xlu0 %1153
        %v1155 = vadd.f32 %v1110, %v1111
        %1156 = vadd.xlane.f32.xlu0 %v1155
        %v1157 = vpop.xlane.xlu0 %1156
        %v1158 = vadd.f32 %v1112, %v1113
        %1159 = vadd.xlane.f32.xlu0 %v1158
        %v1160 = vpop.xlane.xlu0 %1159
        %v1161 = vadd.f32 %v1114, %v1115
        %1162 = vadd.xlane.f32.xlu0 %v1161
        %v1163 = vpop.xlane.xlu0 %1162
        %v1164 = vadd.f32 %v1068, %v1118
        %v1165 = vadd.f32 %v1069, %v1121
        %v1166 = vadd.f32 %v1070, %v1124
        %v1167 = vadd.f32 %v1071, %v1127
        %v1168 = vadd.f32 %v1072, %v1130
        %v1169 = vadd.f32 %v1073, %v1133
        %v1170 = vadd.f32 %v1074, %v1136
        %v1171 = vadd.f32 %v1075, %v1139
        %v1172 = vadd.f32 %v1076, %v1142
        %v1173 = vadd.f32 %v1077, %v1145
        %v1174 = vadd.f32 %v1078, %v1148
        %v1175 = vadd.f32 %v1079, %v1151
        %v1176 = vadd.f32 %v1080, %v1154
        %v1177 = vadd.f32 %v1081, %v1157
        %v1178 = vadd.f32 %v1082, %v1160
        %v1179 = vadd.f32 %v1083, %v1163
        %vm1180 = vcmask 7168
        %1181 = vst.msk [vmem:[#allocation3] sm:$0xff] %vm1180, %v1164
        %1182 = vst.msk [vmem:[#allocation3 + $0x8] sm:$0xff] %vm1180, %v1165
        %1183 = vst.msk [vmem:[#allocation3 + $0x10] sm:$0xff] %vm1180, %v1166
        %1184 = vst.msk [vmem:[#allocation3 + $0x18] sm:$0xff] %vm1180, %v1167
        %1185 = vst.msk [vmem:[#allocation3 + $0x20] sm:$0xff] %vm1180, %v1168
        %1186 = vst.msk [vmem:[#allocation3 + $0x28] sm:$0xff] %vm1180, %v1169
        %1187 = vst.msk [vmem:[#allocation3 + $0x30] sm:$0xff] %vm1180, %v1170
        %1188 = vst.msk [vmem:[#allocation3 + $0x38] sm:$0xff] %vm1180, %v1171
        %1189 = vst.msk [vmem:[#allocation3 + $0x40] sm:$0xff] %vm1180, %v1172
        %1190 = vst.msk [vmem:[#allocation3 + $0x48] sm:$0xff] %vm1180, %v1173
        %1191 = vst.msk [vmem:[#allocation3 + $0x50] sm:$0xff] %vm1180, %v1174
        %1192 = vst.msk [vmem:[#allocation3 + $0x58] sm:$0xff] %vm1180, %v1175
        %1193 = vst.msk [vmem:[#allocation3 + $0x60] sm:$0xff] %vm1180, %v1176
        %1194 = vst.msk [vmem:[#allocation3 + $0x68] sm:$0xff] %vm1180, %v1177
        %1195 = vst.msk [vmem:[#allocation3 + $0x70] sm:$0xff] %vm1180, %v1178
        %1196 = vst.msk [vmem:[#allocation3 + $0x78] sm:$0xff] %vm1180, %v1179
      $region44: #{supervised_contrastive_loss.3} parent=35 // pred_fallthru
        _
      %p1197 = scmp.eq.s32.totalorder %s23, 1
      // Predicated region
      $region45: #{supervised_contrastive_loss.3} parent=35 // pred_check
        %p1198 = pneg %p1197
      $region46: #{supervised_contrastive_loss.3} parent=35 // pred_check_branch
        %1200 = sbr.rel (%p1198) target = $region48
      $region47: #{supervised_contrastive_loss.3} parent=35 // pred_region
        %s1201 = smul.u32 %s24, 32
        %s1202 = smul.addr %s1201, 8
        %s1203 = scalar_lea.vmem [#allocation2], %s1202
        %v1204 = vld [vmem:[%s1203] sm:$0xff]
        %v1205 = vld [vmem:[%s1203 + $0x8] sm:$0xff]
        %v1206 = vld [vmem:[%s1203 + $0x10] sm:$0xff]
        %v1207 = vld [vmem:[%s1203 + $0x18] sm:$0xff]
        %v1208 = vld [vmem:[%s1203 + $0x20] sm:$0xff]
        %v1209 = vld [vmem:[%s1203 + $0x28] sm:$0xff]
        %v1210 = vld [vmem:[%s1203 + $0x30] sm:$0xff]
        %v1211 = vld [vmem:[%s1203 + $0x38] sm:$0xff]
        %v1212 = vld [vmem:[%s1203 + $0x40] sm:$0xff]
        %v1213 = vld [vmem:[%s1203 + $0x48] sm:$0xff]
        %v1214 = vld [vmem:[%s1203 + $0x50] sm:$0xff]
        %v1215 = vld [vmem:[%s1203 + $0x58] sm:$0xff]
        %v1216 = vld [vmem:[%s1203 + $0x60] sm:$0xff]
        %v1217 = vld [vmem:[%s1203 + $0x68] sm:$0xff]
        %v1218 = vld [vmem:[%s1203 + $0x70] sm:$0xff]
        %v1219 = vld [vmem:[%s1203 + $0x78] sm:$0xff]
        %v1220 = vld [vmem:[%s1203 + $0x80] sm:$0xff]
        %v1221 = vld [vmem:[%s1203 + $0x88] sm:$0xff]
        %v1222 = vld [vmem:[%s1203 + $0x90] sm:$0xff]
        %v1223 = vld [vmem:[%s1203 + $0x98] sm:$0xff]
        %v1224 = vld [vmem:[%s1203 + $0xa0] sm:$0xff]
        %v1225 = vld [vmem:[%s1203 + $0xa8] sm:$0xff]
        %v1226 = vld [vmem:[%s1203 + $0xb0] sm:$0xff]
        %v1227 = vld [vmem:[%s1203 + $0xb8] sm:$0xff]
        %v1228 = vld [vmem:[%s1203 + $0xc0] sm:$0xff]
        %v1229 = vld [vmem:[%s1203 + $0xc8] sm:$0xff]
        %v1230 = vld [vmem:[%s1203 + $0xd0] sm:$0xff]
        %v1231 = vld [vmem:[%s1203 + $0xd8] sm:$0xff]
        %v1232 = vld [vmem:[%s1203 + $0xe0] sm:$0xff]
        %v1233 = vld [vmem:[%s1203 + $0xe8] sm:$0xff]
        %v1234 = vld [vmem:[%s1203 + $0xf0] sm:$0xff]
        %v1235 = vld [vmem:[%s1203 + $0xf8] sm:$0xff]
        %vm1236 = vcmp.ne.s32.totalorder %v463, %v484
        %vm1237 = vcmp.ne.s32.totalorder %v463, %v485
        %vm1238 = vcmp.ne.s32.totalorder %v464, %v484
        %vm1239 = vcmp.ne.s32.totalorder %v464, %v485
        %vm1240 = vcmp.ne.s32.totalorder %v465, %v484
        %vm1241 = vcmp.ne.s32.totalorder %v465, %v485
        %vm1242 = vcmp.ne.s32.totalorder %v466, %v484
        %vm1243 = vcmp.ne.s32.totalorder %v466, %v485
        %vm1244 = vcmp.ne.s32.totalorder %v467, %v484
        %vm1245 = vcmp.ne.s32.totalorder %v467, %v485
        %vm1246 = vcmp.ne.s32.totalorder %v468, %v484
        %vm1247 = vcmp.ne.s32.totalorder %v468, %v485
        %vm1248 = vcmp.ne.s32.totalorder %v469, %v484
        %vm1249 = vcmp.ne.s32.totalorder %v469, %v485
        %vm1250 = vcmp.ne.s32.totalorder %v470, %v484
        %vm1251 = vcmp.ne.s32.totalorder %v470, %v485
        %vm1252 = vcmp.ne.s32.totalorder %v471, %v484
        %vm1253 = vcmp.ne.s32.totalorder %v471, %v485
        %vm1254 = vcmp.ne.s32.totalorder %v472, %v484
        %vm1255 = vcmp.ne.s32.totalorder %v472, %v485
        %vm1256 = vcmp.ne.s32.totalorder %v473, %v484
        %vm1257 = vcmp.ne.s32.totalorder %v473, %v485
        %vm1258 = vcmp.ne.s32.totalorder %v474, %v484
        %vm1259 = vcmp.ne.s32.totalorder %v474, %v485
        %vm1260 = vcmp.ne.s32.totalorder %v475, %v484
        %vm1261 = vcmp.ne.s32.totalorder %v475, %v485
        %vm1262 = vcmp.ne.s32.totalorder %v476, %v484
        %vm1263 = vcmp.ne.s32.totalorder %v476, %v485
        %vm1264 = vcmp.ne.s32.totalorder %v477, %v484
        %vm1265 = vcmp.ne.s32.totalorder %v477, %v485
        %vm1266 = vcmp.ne.s32.totalorder %v478, %v484
        %vm1267 = vcmp.ne.s32.totalorder %v478, %v485
        %vm1268 = vmand %vm412, %vm1236
        %vm1269 = vmand %vm413, %vm1237
        %vm1270 = vmand %vm414, %vm1238
        %vm1271 = vmand %vm415, %vm1239
        %vm1272 = vmand %vm416, %vm1240
        %vm1273 = vmand %vm417, %vm1241
        %vm1274 = vmand %vm418, %vm1242
        %vm1275 = vmand %vm419, %vm1243
        %vm1276 = vmand %vm420, %vm1244
        %vm1277 = vmand %vm421, %vm1245
        %vm1278 = vmand %vm422, %vm1246
        %vm1279 = vmand %vm423, %vm1247
        %vm1280 = vmand %vm424, %vm1248
        %vm1281 = vmand %vm425, %vm1249
        %vm1282 = vmand %vm426, %vm1250
        %vm1283 = vmand %vm427, %vm1251
        %vm1284 = vmand %vm428, %vm1252
        %vm1285 = vmand %vm429, %vm1253
        %vm1286 = vmand %vm430, %vm1254
        %vm1287 = vmand %vm431, %vm1255
        %vm1288 = vmand %vm432, %vm1256
        %vm1289 = vmand %vm433, %vm1257
        %vm1290 = vmand %vm434, %vm1258
        %vm1291 = vmand %vm435, %vm1259
        %vm1292 = vmand %vm436, %vm1260
        %vm1293 = vmand %vm437, %vm1261
        %vm1294 = vmand %vm438, %vm1262
        %vm1295 = vmand %vm439, %vm1263
        %vm1296 = vmand %vm440, %vm1264
        %vm1297 = vmand %vm441, %vm1265
        %vm1298 = vmand %vm442, %vm1266
        %vm1299 = vmand %vm443, %vm1267
        %v1300 = vsel %vm486, 1, 0
        %v1301 = vsel %vm487, 1, 0
        %v1302 = vsel %vm488, 1, 0
        %v1303 = vsel %vm489, 1, 0
        %v1304 = vsel %vm490, 1, 0
        %v1305 = vsel %vm491, 1, 0
        %v1306 = vsel %vm492, 1, 0
        %v1307 = vsel %vm493, 1, 0
        %v1308 = vsel %vm494, 1, 0
        %v1309 = vsel %vm495, 1, 0
        %v1310 = vsel %vm496, 1, 0
        %v1311 = vsel %vm497, 1, 0
        %v1312 = vsel %vm498, 1, 0
        %v1313 = vsel %vm499, 1, 0
        %v1314 = vsel %vm500, 1, 0
        %v1315 = vsel %vm501, 1, 0
        %vm1316 = vcmp.eq.s32.totalorder %v1300, 1
        %vm1317 = vcmp.eq.s32.totalorder %v1301, 1
        %vm1318 = vcmp.eq.s32.totalorder %v1302, 1
        %vm1319 = vcmp.eq.s32.totalorder %v1303, 1
        %vm1320 = vcmp.eq.s32.totalorder %v1304, 1
        %vm1321 = vcmp.eq.s32.totalorder %v1305, 1
        %vm1322 = vcmp.eq.s32.totalorder %v1306, 1
        %vm1323 = vcmp.eq.s32.totalorder %v1307, 1
        %vm1324 = vcmp.eq.s32.totalorder %v1308, 1
        %vm1325 = vcmp.eq.s32.totalorder %v1309, 1
        %vm1326 = vcmp.eq.s32.totalorder %v1310, 1
        %vm1327 = vcmp.eq.s32.totalorder %v1311, 1
        %vm1328 = vcmp.eq.s32.totalorder %v1312, 1
        %vm1329 = vcmp.eq.s32.totalorder %v1313, 1
        %vm1330 = vcmp.eq.s32.totalorder %v1314, 1
        %vm1331 = vcmp.eq.s32.totalorder %v1315, 1
        %v1332 = vsel %vm502, 1, 0
        %v1333 = vsel %vm503, 1, 0
        %vm1334 = vcmp.eq.s32.totalorder %v1332, 1
        %vm1335 = vcmp.eq.s32.totalorder %v1333, 1
        %vm1336 = vmand %vm1316, %vm1334
        %vm1337 = vmand %vm1316, %vm1335
        %vm1338 = vmand %vm1317, %vm1334
        %vm1339 = vmand %vm1317, %vm1335
        %vm1340 = vmand %vm1318, %vm1334
        %vm1341 = vmand %vm1318, %vm1335
        %vm1342 = vmand %vm1319, %vm1334
        %vm1343 = vmand %vm1319, %vm1335
        %vm1344 = vmand %vm1320, %vm1334
        %vm1345 = vmand %vm1320, %vm1335
        %vm1346 = vmand %vm1321, %vm1334
        %vm1347 = vmand %vm1321, %vm1335
        %vm1348 = vmand %vm1322, %vm1334
        %vm1349 = vmand %vm1322, %vm1335
        %vm1350 = vmand %vm1323, %vm1334
        %vm1351 = vmand %vm1323, %vm1335
        %vm1352 = vmand %vm1324, %vm1334
        %vm1353 = vmand %vm1324, %vm1335
        %vm1354 = vmand %vm1325, %vm1334
        %vm1355 = vmand %vm1325, %vm1335
        %vm1356 = vmand %vm1326, %vm1334
        %vm1357 = vmand %vm1326, %vm1335
        %vm1358 = vmand %vm1327, %vm1334
        %vm1359 = vmand %vm1327, %vm1335
        %vm1360 = vmand %vm1328, %vm1334
        %vm1361 = vmand %vm1328, %vm1335
        %vm1362 = vmand %vm1329, %vm1334
        %vm1363 = vmand %vm1329, %vm1335
        %vm1364 = vmand %vm1330, %vm1334
        %vm1365 = vmand %vm1330, %vm1335
        %vm1366 = vmand %vm1331, %vm1334
        %vm1367 = vmand %vm1331, %vm1335
        %vm1368 = vmand %vm1268, %vm1336
        %vm1369 = vmand %vm1269, %vm1337
        %vm1370 = vmand %vm1270, %vm1338
        %vm1371 = vmand %vm1271, %vm1339
        %vm1372 = vmand %vm1272, %vm1340
        %vm1373 = vmand %vm1273, %vm1341
        %vm1374 = vmand %vm1274, %vm1342
        %vm1375 = vmand %vm1275, %vm1343
        %vm1376 = vmand %vm1276, %vm1344
        %vm1377 = vmand %vm1277, %vm1345
        %vm1378 = vmand %vm1278, %vm1346
        %vm1379 = vmand %vm1279, %vm1347
        %vm1380 = vmand %vm1280, %vm1348
        %vm1381 = vmand %vm1281, %vm1349
        %vm1382 = vmand %vm1282, %vm1350
        %vm1383 = vmand %vm1283, %vm1351
        %vm1384 = vmand %vm1284, %vm1352
        %vm1385 = vmand %vm1285, %vm1353
        %vm1386 = vmand %vm1286, %vm1354
        %vm1387 = vmand %vm1287, %vm1355
        %vm1388 = vmand %vm1288, %vm1356
        %vm1389 = vmand %vm1289, %vm1357
        %vm1390 = vmand %vm1290, %vm1358
        %vm1391 = vmand %vm1291, %vm1359
        %vm1392 = vmand %vm1292, %vm1360
        %vm1393 = vmand %vm1293, %vm1361
        %vm1394 = vmand %vm1294, %vm1362
        %vm1395 = vmand %vm1295, %vm1363
        %vm1396 = vmand %vm1296, %vm1364
        %vm1397 = vmand %vm1297, %vm1365
        %vm1398 = vmand %vm1298, %vm1366
        %vm1399 = vmand %vm1299, %vm1367
        %v1400 = vld [vmem:[#allocation3] sm:$0xff]
        %v1401 = vld [vmem:[#allocation3 + $0x8] sm:$0xff]
        %v1402 = vld [vmem:[#allocation3 + $0x10] sm:$0xff]
        %v1403 = vld [vmem:[#allocation3 + $0x18] sm:$0xff]
        %v1404 = vld [vmem:[#allocation3 + $0x20] sm:$0xff]
        %v1405 = vld [vmem:[#allocation3 + $0x28] sm:$0xff]
        %v1406 = vld [vmem:[#allocation3 + $0x30] sm:$0xff]
        %v1407 = vld [vmem:[#allocation3 + $0x38] sm:$0xff]
        %v1408 = vld [vmem:[#allocation3 + $0x40] sm:$0xff]
        %v1409 = vld [vmem:[#allocation3 + $0x48] sm:$0xff]
        %v1410 = vld [vmem:[#allocation3 + $0x50] sm:$0xff]
        %v1411 = vld [vmem:[#allocation3 + $0x58] sm:$0xff]
        %v1412 = vld [vmem:[#allocation3 + $0x60] sm:$0xff]
        %v1413 = vld [vmem:[#allocation3 + $0x68] sm:$0xff]
        %v1414 = vld [vmem:[#allocation3 + $0x70] sm:$0xff]
        %v1415 = vld [vmem:[#allocation3 + $0x78] sm:$0xff]
        %1417 = vset.pattern.permute.xlu0 0
        %1418 = vperm.xlu0 %1417, %v1400
        %v1419 = vpop.permute.xlu0 %1418
        %1422 = vset.pattern.permute.xlu0 0
        %1423 = vperm.xlu0 %1422, %v1401
        %v1424 = vpop.permute.xlu0 %1423
        %1427 = vset.pattern.permute.xlu0 0
        %1428 = vperm.xlu0 %1427, %v1402
        %v1429 = vpop.permute.xlu0 %1428
        %1432 = vset.pattern.permute.xlu0 0
        %1433 = vperm.xlu0 %1432, %v1403
        %v1434 = vpop.permute.xlu0 %1433
        %1437 = vset.pattern.permute.xlu0 0
        %1438 = vperm.xlu0 %1437, %v1404
        %v1439 = vpop.permute.xlu0 %1438
        %1442 = vset.pattern.permute.xlu0 0
        %1443 = vperm.xlu0 %1442, %v1405
        %v1444 = vpop.permute.xlu0 %1443
        %1447 = vset.pattern.permute.xlu0 0
        %1448 = vperm.xlu0 %1447, %v1406
        %v1449 = vpop.permute.xlu0 %1448
        %1452 = vset.pattern.permute.xlu0 0
        %1453 = vperm.xlu0 %1452, %v1407
        %v1454 = vpop.permute.xlu0 %1453
        %1457 = vset.pattern.permute.xlu0 0
        %1458 = vperm.xlu0 %1457, %v1408
        %v1459 = vpop.permute.xlu0 %1458
        %1462 = vset.pattern.permute.xlu0 0
        %1463 = vperm.xlu0 %1462, %v1409
        %v1464 = vpop.permute.xlu0 %1463
        %1467 = vset.pattern.permute.xlu0 0
        %1468 = vperm.xlu0 %1467, %v1410
        %v1469 = vpop.permute.xlu0 %1468
        %1472 = vset.pattern.permute.xlu0 0
        %1473 = vperm.xlu0 %1472, %v1411
        %v1474 = vpop.permute.xlu0 %1473
        %1477 = vset.pattern.permute.xlu0 0
        %1478 = vperm.xlu0 %1477, %v1412
        %v1479 = vpop.permute.xlu0 %1478
        %1482 = vset.pattern.permute.xlu0 0
        %1483 = vperm.xlu0 %1482, %v1413
        %v1484 = vpop.permute.xlu0 %1483
        %1487 = vset.pattern.permute.xlu0 0
        %1488 = vperm.xlu0 %1487, %v1414
        %v1489 = vpop.permute.xlu0 %1488
        %1492 = vset.pattern.permute.xlu0 0
        %1493 = vperm.xlu0 %1492, %v1415
        %v1494 = vpop.permute.xlu0 %1493
        %v1496 = vadd.f32 %v1419, %v1204
        %v1497 = vadd.f32 %v1419, %v1205
        %v1498 = vadd.f32 %v1424, %v1206
        %v1499 = vadd.f32 %v1424, %v1207
        %v1500 = vadd.f32 %v1429, %v1208
        %v1501 = vadd.f32 %v1429, %v1209
        %v1502 = vadd.f32 %v1434, %v1210
        %v1503 = vadd.f32 %v1434, %v1211
        %v1504 = vadd.f32 %v1439, %v1212
        %v1505 = vadd.f32 %v1439, %v1213
        %v1506 = vadd.f32 %v1444, %v1214
        %v1507 = vadd.f32 %v1444, %v1215
        %v1508 = vadd.f32 %v1449, %v1216
        %v1509 = vadd.f32 %v1449, %v1217
        %v1510 = vadd.f32 %v1454, %v1218
        %v1511 = vadd.f32 %v1454, %v1219
        %v1512 = vadd.f32 %v1459, %v1220
        %v1513 = vadd.f32 %v1459, %v1221
        %v1514 = vadd.f32 %v1464, %v1222
        %v1515 = vadd.f32 %v1464, %v1223
        %v1516 = vadd.f32 %v1469, %v1224
        %v1517 = vadd.f32 %v1469, %v1225
        %v1518 = vadd.f32 %v1474, %v1226
        %v1519 = vadd.f32 %v1474, %v1227
        %v1520 = vadd.f32 %v1479, %v1228
        %v1521 = vadd.f32 %v1479, %v1229
        %v1522 = vadd.f32 %v1484, %v1230
        %v1523 = vadd.f32 %v1484, %v1231
        %v1524 = vadd.f32 %v1489, %v1232
        %v1525 = vadd.f32 %v1489, %v1233
        %v1526 = vadd.f32 %v1494, %v1234
        %v1527 = vadd.f32 %v1494, %v1235
        %v1528 = vadd.f32 %v1496, 1e-05
        %v1529 = vadd.f32 %v1497, 1e-05
        %v1530 = vadd.f32 %v1498, 1e-05
        %v1531 = vadd.f32 %v1499, 1e-05
        %v1532 = vadd.f32 %v1500, 1e-05
        %v1533 = vadd.f32 %v1501, 1e-05
        %v1534 = vadd.f32 %v1502, 1e-05
        %v1535 = vadd.f32 %v1503, 1e-05
        %v1536 = vadd.f32 %v1504, 1e-05
        %v1537 = vadd.f32 %v1505, 1e-05
        %v1538 = vadd.f32 %v1506, 1e-05
        %v1539 = vadd.f32 %v1507, 1e-05
        %v1540 = vadd.f32 %v1508, 1e-05
        %v1541 = vadd.f32 %v1509, 1e-05
        %v1542 = vadd.f32 %v1510, 1e-05
        %v1543 = vadd.f32 %v1511, 1e-05
        %v1544 = vadd.f32 %v1512, 1e-05
        %v1545 = vadd.f32 %v1513, 1e-05
        %v1546 = vadd.f32 %v1514, 1e-05
        %v1547 = vadd.f32 %v1515, 1e-05
        %v1548 = vadd.f32 %v1516, 1e-05
        %v1549 = vadd.f32 %v1517, 1e-05
        %v1550 = vadd.f32 %v1518, 1e-05
        %v1551 = vadd.f32 %v1519, 1e-05
        %v1552 = vadd.f32 %v1520, 1e-05
        %v1553 = vadd.f32 %v1521, 1e-05
        %v1554 = vadd.f32 %v1522, 1e-05
        %v1555 = vadd.f32 %v1523, 1e-05
        %v1556 = vadd.f32 %v1524, 1e-05
        %v1557 = vadd.f32 %v1525, 1e-05
        %v1558 = vadd.f32 %v1526, 1e-05
        %v1559 = vadd.f32 %v1527, 1e-05
        %v1560 = vrcp.pop %v1204
        %v1561 = vmul.f32 1.0, %v1560
        %v1562 = vrcp.pop %v1205
        %v1563 = vmul.f32 1.0, %v1562
        %v1564 = vrcp.pop %v1206
        %v1565 = vmul.f32 1.0, %v1564
        %v1566 = vrcp.pop %v1207
        %v1567 = vmul.f32 1.0, %v1566
        %v1568 = vrcp.pop %v1208
        %v1569 = vmul.f32 1.0, %v1568
        %v1570 = vrcp.pop %v1209
        %v1571 = vmul.f32 1.0, %v1570
        %v1572 = vrcp.pop %v1210
        %v1573 = vmul.f32 1.0, %v1572
        %v1574 = vrcp.pop %v1211
        %v1575 = vmul.f32 1.0, %v1574
        %v1576 = vrcp.pop %v1212
        %v1577 = vmul.f32 1.0, %v1576
        %v1578 = vrcp.pop %v1213
        %v1579 = vmul.f32 1.0, %v1578
        %v1580 = vrcp.pop %v1214
        %v1581 = vmul.f32 1.0, %v1580
        %v1582 = vrcp.pop %v1215
        %v1583 = vmul.f32 1.0, %v1582
        %v1584 = vrcp.pop %v1216
        %v1585 = vmul.f32 1.0, %v1584
        %v1586 = vrcp.pop %v1217
        %v1587 = vmul.f32 1.0, %v1586
        %v1588 = vrcp.pop %v1218
        %v1589 = vmul.f32 1.0, %v1588
        %v1590 = vrcp.pop %v1219
        %v1591 = vmul.f32 1.0, %v1590
        %v1592 = vrcp.pop %v1220
        %v1593 = vmul.f32 1.0, %v1592
        %v1594 = vrcp.pop %v1221
        %v1595 = vmul.f32 1.0, %v1594
        %v1596 = vrcp.pop %v1222
        %v1597 = vmul.f32 1.0, %v1596
        %v1598 = vrcp.pop %v1223
        %v1599 = vmul.f32 1.0, %v1598
        %v1600 = vrcp.pop %v1224
        %v1601 = vmul.f32 1.0, %v1600
        %v1602 = vrcp.pop %v1225
        %v1603 = vmul.f32 1.0, %v1602
        %v1604 = vrcp.pop %v1226
        %v1605 = vmul.f32 1.0, %v1604
        %v1606 = vrcp.pop %v1227
        %v1607 = vmul.f32 1.0, %v1606
        %v1608 = vrcp.pop %v1228
        %v1609 = vmul.f32 1.0, %v1608
        %v1610 = vrcp.pop %v1229
        %v1611 = vmul.f32 1.0, %v1610
        %v1612 = vrcp.pop %v1230
        %v1613 = vmul.f32 1.0, %v1612
        %v1614 = vrcp.pop %v1231
        %v1615 = vmul.f32 1.0, %v1614
        %v1616 = vrcp.pop %v1232
        %v1617 = vmul.f32 1.0, %v1616
        %v1618 = vrcp.pop %v1233
        %v1619 = vmul.f32 1.0, %v1618
        %v1620 = vrcp.pop %v1234
        %v1621 = vmul.f32 1.0, %v1620
        %v1622 = vrcp.pop %v1235
        %v1623 = vmul.f32 1.0, %v1622
        %v1624 = vmul.f32 %v1528, %v1561
        %v1625 = vmul.f32 %v1529, %v1563
        %v1626 = vmul.f32 %v1530, %v1565
        %v1627 = vmul.f32 %v1531, %v1567
        %v1628 = vmul.f32 %v1532, %v1569
        %v1629 = vmul.f32 %v1533, %v1571
        %v1630 = vmul.f32 %v1534, %v1573
        %v1631 = vmul.f32 %v1535, %v1575
        %v1632 = vmul.f32 %v1536, %v1577
        %v1633 = vmul.f32 %v1537, %v1579
        %v1634 = vmul.f32 %v1538, %v1581
        %v1635 = vmul.f32 %v1539, %v1583
        %v1636 = vmul.f32 %v1540, %v1585
        %v1637 = vmul.f32 %v1541, %v1587
        %v1638 = vmul.f32 %v1542, %v1589
        %v1639 = vmul.f32 %v1543, %v1591
        %v1640 = vmul.f32 %v1544, %v1593
        %v1641 = vmul.f32 %v1545, %v1595
        %v1642 = vmul.f32 %v1546, %v1597
        %v1643 = vmul.f32 %v1547, %v1599
        %v1644 = vmul.f32 %v1548, %v1601
        %v1645 = vmul.f32 %v1549, %v1603
        %v1646 = vmul.f32 %v1550, %v1605
        %v1647 = vmul.f32 %v1551, %v1607
        %v1648 = vmul.f32 %v1552, %v1609
        %v1649 = vmul.f32 %v1553, %v1611
        %v1650 = vmul.f32 %v1554, %v1613
        %v1651 = vmul.f32 %v1555, %v1615
        %v1652 = vmul.f32 %v1556, %v1617
        %v1653 = vmul.f32 %v1557, %v1619
        %v1654 = vmul.f32 %v1558, %v1621
        %v1655 = vmul.f32 %v1559, %v1623
        %v1656 = vlog2.pop %v1624
        %v1657 = vmul.f32 %v1656, 0.6931472
        %v1658 = vlog2.pop %v1625
        %v1659 = vmul.f32 %v1658, 0.6931472
        %v1660 = vlog2.pop %v1626
        %v1661 = vmul.f32 %v1660, 0.6931472
        %v1662 = vlog2.pop %v1627
        %v1663 = vmul.f32 %v1662, 0.6931472
        %v1664 = vlog2.pop %v1628
        %v1665 = vmul.f32 %v1664, 0.6931472
        %v1666 = vlog2.pop %v1629
        %v1667 = vmul.f32 %v1666, 0.6931472
        %v1668 = vlog2.pop %v1630
        %v1669 = vmul.f32 %v1668, 0.6931472
        %v1670 = vlog2.pop %v1631
        %v1671 = vmul.f32 %v1670, 0.6931472
        %v1672 = vlog2.pop %v1632
        %v1673 = vmul.f32 %v1672, 0.6931472
        %v1674 = vlog2.pop %v1633
        %v1675 = vmul.f32 %v1674, 0.6931472
        %v1676 = vlog2.pop %v1634
        %v1677 = vmul.f32 %v1676, 0.6931472
        %v1678 = vlog2.pop %v1635
        %v1679 = vmul.f32 %v1678, 0.6931472
        %v1680 = vlog2.pop %v1636
        %v1681 = vmul.f32 %v1680, 0.6931472
        %v1682 = vlog2.pop %v1637
        %v1683 = vmul.f32 %v1682, 0.6931472
        %v1684 = vlog2.pop %v1638
        %v1685 = vmul.f32 %v1684, 0.6931472
        %v1686 = vlog2.pop %v1639
        %v1687 = vmul.f32 %v1686, 0.6931472
        %v1688 = vlog2.pop %v1640
        %v1689 = vmul.f32 %v1688, 0.6931472
        %v1690 = vlog2.pop %v1641
        %v1691 = vmul.f32 %v1690, 0.6931472
        %v1692 = vlog2.pop %v1642
        %v1693 = vmul.f32 %v1692, 0.6931472
        %v1694 = vlog2.pop %v1643
        %v1695 = vmul.f32 %v1694, 0.6931472
        %v1696 = vlog2.pop %v1644
        %v1697 = vmul.f32 %v1696, 0.6931472
        %v1698 = vlog2.pop %v1645
        %v1699 = vmul.f32 %v1698, 0.6931472
        %v1700 = vlog2.pop %v1646
        %v1701 = vmul.f32 %v1700, 0.6931472
        %v1702 = vlog2.pop %v1647
        %v1703 = vmul.f32 %v1702, 0.6931472
        %v1704 = vlog2.pop %v1648
        %v1705 = vmul.f32 %v1704, 0.6931472
        %v1706 = vlog2.pop %v1649
        %v1707 = vmul.f32 %v1706, 0.6931472
        %v1708 = vlog2.pop %v1650
        %v1709 = vmul.f32 %v1708, 0.6931472
        %v1710 = vlog2.pop %v1651
        %v1711 = vmul.f32 %v1710, 0.6931472
        %v1712 = vlog2.pop %v1652
        %v1713 = vmul.f32 %v1712, 0.6931472
        %v1714 = vlog2.pop %v1653
        %v1715 = vmul.f32 %v1714, 0.6931472
        %v1716 = vlog2.pop %v1654
        %v1717 = vmul.f32 %v1716, 0.6931472
        %v1718 = vlog2.pop %v1655
        %v1719 = vmul.f32 %v1718, 0.6931472
        %v1720 = vld [vmem:[#allocation4] sm:$0xff]
        %v1721 = vld [vmem:[#allocation4 + $0x8] sm:$0xff]
        %v1722 = vld [vmem:[#allocation4 + $0x10] sm:$0xff]
        %v1723 = vld [vmem:[#allocation4 + $0x18] sm:$0xff]
        %v1724 = vld [vmem:[#allocation4 + $0x20] sm:$0xff]
        %v1725 = vld [vmem:[#allocation4 + $0x28] sm:$0xff]
        %v1726 = vld [vmem:[#allocation4 + $0x30] sm:$0xff]
        %v1727 = vld [vmem:[#allocation4 + $0x38] sm:$0xff]
        %v1728 = vld [vmem:[#allocation4 + $0x40] sm:$0xff]
        %v1729 = vld [vmem:[#allocation4 + $0x48] sm:$0xff]
        %v1730 = vld [vmem:[#allocation4 + $0x50] sm:$0xff]
        %v1731 = vld [vmem:[#allocation4 + $0x58] sm:$0xff]
        %v1732 = vld [vmem:[#allocation4 + $0x60] sm:$0xff]
        %v1733 = vld [vmem:[#allocation4 + $0x68] sm:$0xff]
        %v1734 = vld [vmem:[#allocation4 + $0x70] sm:$0xff]
        %v1735 = vld [vmem:[#allocation4 + $0x78] sm:$0xff]
        %v1736 = vsel %vm1368, %v1657, 0.0
        %v1737 = vsel %vm1369, %v1659, 0.0
        %v1738 = vsel %vm1370, %v1661, 0.0
        %v1739 = vsel %vm1371, %v1663, 0.0
        %v1740 = vsel %vm1372, %v1665, 0.0
        %v1741 = vsel %vm1373, %v1667, 0.0
        %v1742 = vsel %vm1374, %v1669, 0.0
        %v1743 = vsel %vm1375, %v1671, 0.0
        %v1744 = vsel %vm1376, %v1673, 0.0
        %v1745 = vsel %vm1377, %v1675, 0.0
        %v1746 = vsel %vm1378, %v1677, 0.0
        %v1747 = vsel %vm1379, %v1679, 0.0
        %v1748 = vsel %vm1380, %v1681, 0.0
        %v1749 = vsel %vm1381, %v1683, 0.0
        %v1750 = vsel %vm1382, %v1685, 0.0
        %v1751 = vsel %vm1383, %v1687, 0.0
        %v1752 = vsel %vm1384, %v1689, 0.0
        %v1753 = vsel %vm1385, %v1691, 0.0
        %v1754 = vsel %vm1386, %v1693, 0.0
        %v1755 = vsel %vm1387, %v1695, 0.0
        %v1756 = vsel %vm1388, %v1697, 0.0
        %v1757 = vsel %vm1389, %v1699, 0.0
        %v1758 = vsel %vm1390, %v1701, 0.0
        %v1759 = vsel %vm1391, %v1703, 0.0
        %v1760 = vsel %vm1392, %v1705, 0.0
        %v1761 = vsel %vm1393, %v1707, 0.0
        %v1762 = vsel %vm1394, %v1709, 0.0
        %v1763 = vsel %vm1395, %v1711, 0.0
        %v1764 = vsel %vm1396, %v1713, 0.0
        %v1765 = vsel %vm1397, %v1715, 0.0
        %v1766 = vsel %vm1398, %v1717, 0.0
        %v1767 = vsel %vm1399, %v1719, 0.0
        %v1768 = vadd.f32 %v1736, %v1737
        %1769 = vadd.xlane.f32.xlu0 %v1768
        %v1770 = vpop.xlane.xlu0 %1769
        %v1771 = vadd.f32 %v1738, %v1739
        %1772 = vadd.xlane.f32.xlu0 %v1771
        %v1773 = vpop.xlane.xlu0 %1772
        %v1774 = vadd.f32 %v1740, %v1741
        %1775 = vadd.xlane.f32.xlu0 %v1774
        %v1776 = vpop.xlane.xlu0 %1775
        %v1777 = vadd.f32 %v1742, %v1743
        %1778 = vadd.xlane.f32.xlu0 %v1777
        %v1779 = vpop.xlane.xlu0 %1778
        %v1780 = vadd.f32 %v1744, %v1745
        %1781 = vadd.xlane.f32.xlu0 %v1780
        %v1782 = vpop.xlane.xlu0 %1781
        %v1783 = vadd.f32 %v1746, %v1747
        %1784 = vadd.xlane.f32.xlu0 %v1783
        %v1785 = vpop.xlane.xlu0 %1784
        %v1786 = vadd.f32 %v1748, %v1749
        %1787 = vadd.xlane.f32.xlu0 %v1786
        %v1788 = vpop.xlane.xlu0 %1787
        %v1789 = vadd.f32 %v1750, %v1751
        %1790 = vadd.xlane.f32.xlu0 %v1789
        %v1791 = vpop.xlane.xlu0 %1790
        %v1792 = vadd.f32 %v1752, %v1753
        %1793 = vadd.xlane.f32.xlu0 %v1792
        %v1794 = vpop.xlane.xlu0 %1793
        %v1795 = vadd.f32 %v1754, %v1755
        %1796 = vadd.xlane.f32.xlu0 %v1795
        %v1797 = vpop.xlane.xlu0 %1796
        %v1798 = vadd.f32 %v1756, %v1757
        %1799 = vadd.xlane.f32.xlu0 %v1798
        %v1800 = vpop.xlane.xlu0 %1799
        %v1801 = vadd.f32 %v1758, %v1759
        %1802 = vadd.xlane.f32.xlu0 %v1801
        %v1803 = vpop.xlane.xlu0 %1802
        %v1804 = vadd.f32 %v1760, %v1761
        %1805 = vadd.xlane.f32.xlu0 %v1804
        %v1806 = vpop.xlane.xlu0 %1805
        %v1807 = vadd.f32 %v1762, %v1763
        %1808 = vadd.xlane.f32.xlu0 %v1807
        %v1809 = vpop.xlane.xlu0 %1808
        %v1810 = vadd.f32 %v1764, %v1765
        %1811 = vadd.xlane.f32.xlu0 %v1810
        %v1812 = vpop.xlane.xlu0 %1811
        %v1813 = vadd.f32 %v1766, %v1767
        %1814 = vadd.xlane.f32.xlu0 %v1813
        %v1815 = vpop.xlane.xlu0 %1814
        %v1816 = vadd.f32 %v1720, %v1770
        %v1817 = vadd.f32 %v1721, %v1773
        %v1818 = vadd.f32 %v1722, %v1776
        %v1819 = vadd.f32 %v1723, %v1779
        %v1820 = vadd.f32 %v1724, %v1782
        %v1821 = vadd.f32 %v1725, %v1785
        %v1822 = vadd.f32 %v1726, %v1788
        %v1823 = vadd.f32 %v1727, %v1791
        %v1824 = vadd.f32 %v1728, %v1794
        %v1825 = vadd.f32 %v1729, %v1797
        %v1826 = vadd.f32 %v1730, %v1800
        %v1827 = vadd.f32 %v1731, %v1803
        %v1828 = vadd.f32 %v1732, %v1806
        %v1829 = vadd.f32 %v1733, %v1809
        %v1830 = vadd.f32 %v1734, %v1812
        %v1831 = vadd.f32 %v1735, %v1815
        %vm1832 = vcmask 7168
        %1833 = vst.msk [vmem:[#allocation4] sm:$0xff] %vm1832, %v1816
        %1834 = vst.msk [vmem:[#allocation4 + $0x8] sm:$0xff] %vm1832, %v1817
        %1835 = vst.msk [vmem:[#allocation4 + $0x10] sm:$0xff] %vm1832, %v1818
        %1836 = vst.msk [vmem:[#allocation4 + $0x18] sm:$0xff] %vm1832, %v1819
        %1837 = vst.msk [vmem:[#allocation4 + $0x20] sm:$0xff] %vm1832, %v1820
        %1838 = vst.msk [vmem:[#allocation4 + $0x28] sm:$0xff] %vm1832, %v1821
        %1839 = vst.msk [vmem:[#allocation4 + $0x30] sm:$0xff] %vm1832, %v1822
        %1840 = vst.msk [vmem:[#allocation4 + $0x38] sm:$0xff] %vm1832, %v1823
        %1841 = vst.msk [vmem:[#allocation4 + $0x40] sm:$0xff] %vm1832, %v1824
        %1842 = vst.msk [vmem:[#allocation4 + $0x48] sm:$0xff] %vm1832, %v1825
        %1843 = vst.msk [vmem:[#allocation4 + $0x50] sm:$0xff] %vm1832, %v1826
        %1844 = vst.msk [vmem:[#allocation4 + $0x58] sm:$0xff] %vm1832, %v1827
        %1845 = vst.msk [vmem:[#allocation4 + $0x60] sm:$0xff] %vm1832, %v1828
        %1846 = vst.msk [vmem:[#allocation4 + $0x68] sm:$0xff] %vm1832, %v1829
        %1847 = vst.msk [vmem:[#allocation4 + $0x70] sm:$0xff] %vm1832, %v1830
        %1848 = vst.msk [vmem:[#allocation4 + $0x78] sm:$0xff] %vm1832, %v1831
        %v1849 = vld [vmem:[#allocation5] sm:$0xff]
        %v1850 = vld [vmem:[#allocation5 + $0x8] sm:$0xff]
        %v1851 = vld [vmem:[#allocation5 + $0x10] sm:$0xff]
        %v1852 = vld [vmem:[#allocation5 + $0x18] sm:$0xff]
        %v1853 = vld [vmem:[#allocation5 + $0x20] sm:$0xff]
        %v1854 = vld [vmem:[#allocation5 + $0x28] sm:$0xff]
        %v1855 = vld [vmem:[#allocation5 + $0x30] sm:$0xff]
        %v1856 = vld [vmem:[#allocation5 + $0x38] sm:$0xff]
        %v1857 = vld [vmem:[#allocation5 + $0x40] sm:$0xff]
        %v1858 = vld [vmem:[#allocation5 + $0x48] sm:$0xff]
        %v1859 = vld [vmem:[#allocation5 + $0x50] sm:$0xff]
        %v1860 = vld [vmem:[#allocation5 + $0x58] sm:$0xff]
        %v1861 = vld [vmem:[#allocation5 + $0x60] sm:$0xff]
        %v1862 = vld [vmem:[#allocation5 + $0x68] sm:$0xff]
        %v1863 = vld [vmem:[#allocation5 + $0x70] sm:$0xff]
        %v1864 = vld [vmem:[#allocation5 + $0x78] sm:$0xff]
        %v1865 = vsel %vm1368, 1.0, 0.0
        %v1866 = vsel %vm1369, 1.0, 0.0
        %v1867 = vsel %vm1370, 1.0, 0.0
        %v1868 = vsel %vm1371, 1.0, 0.0
        %v1869 = vsel %vm1372, 1.0, 0.0
        %v1870 = vsel %vm1373, 1.0, 0.0
        %v1871 = vsel %vm1374, 1.0, 0.0
        %v1872 = vsel %vm1375, 1.0, 0.0
        %v1873 = vsel %vm1376, 1.0, 0.0
        %v1874 = vsel %vm1377, 1.0, 0.0
        %v1875 = vsel %vm1378, 1.0, 0.0
        %v1876 = vsel %vm1379, 1.0, 0.0
        %v1877 = vsel %vm1380, 1.0, 0.0
        %v1878 = vsel %vm1381, 1.0, 0.0
        %v1879 = vsel %vm1382, 1.0, 0.0
        %v1880 = vsel %vm1383, 1.0, 0.0
        %v1881 = vsel %vm1384, 1.0, 0.0
        %v1882 = vsel %vm1385, 1.0, 0.0
        %v1883 = vsel %vm1386, 1.0, 0.0
        %v1884 = vsel %vm1387, 1.0, 0.0
        %v1885 = vsel %vm1388, 1.0, 0.0
        %v1886 = vsel %vm1389, 1.0, 0.0
        %v1887 = vsel %vm1390, 1.0, 0.0
        %v1888 = vsel %vm1391, 1.0, 0.0
        %v1889 = vsel %vm1392, 1.0, 0.0
        %v1890 = vsel %vm1393, 1.0, 0.0
        %v1891 = vsel %vm1394, 1.0, 0.0
        %v1892 = vsel %vm1395, 1.0, 0.0
        %v1893 = vsel %vm1396, 1.0, 0.0
        %v1894 = vsel %vm1397, 1.0, 0.0
        %v1895 = vsel %vm1398, 1.0, 0.0
        %v1896 = vsel %vm1399, 1.0, 0.0
        %v1897 = vadd.f32 %v1865, %v1866
        %1898 = vadd.xlane.f32.xlu0 %v1897
        %v1899 = vpop.xlane.xlu0 %1898
        %v1900 = vadd.f32 %v1867, %v1868
        %1901 = vadd.xlane.f32.xlu0 %v1900
        %v1902 = vpop.xlane.xlu0 %1901
        %v1903 = vadd.f32 %v1869, %v1870
        %1904 = vadd.xlane.f32.xlu0 %v1903
        %v1905 = vpop.xlane.xlu0 %1904
        %v1906 = vadd.f32 %v1871, %v1872
        %1907 = vadd.xlane.f32.xlu0 %v1906
        %v1908 = vpop.xlane.xlu0 %1907
        %v1909 = vadd.f32 %v1873, %v1874
        %1910 = vadd.xlane.f32.xlu0 %v1909
        %v1911 = vpop.xlane.xlu0 %1910
        %v1912 = vadd.f32 %v1875, %v1876
        %1913 = vadd.xlane.f32.xlu0 %v1912
        %v1914 = vpop.xlane.xlu0 %1913
        %v1915 = vadd.f32 %v1877, %v1878
        %1916 = vadd.xlane.f32.xlu0 %v1915
        %v1917 = vpop.xlane.xlu0 %1916
        %v1918 = vadd.f32 %v1879, %v1880
        %1919 = vadd.xlane.f32.xlu0 %v1918
        %v1920 = vpop.xlane.xlu0 %1919
        %v1921 = vadd.f32 %v1881, %v1882
        %1922 = vadd.xlane.f32.xlu0 %v1921
        %v1923 = vpop.xlane.xlu0 %1922
        %v1924 = vadd.f32 %v1883, %v1884
        %1925 = vadd.xlane.f32.xlu0 %v1924
        %v1926 = vpop.xlane.xlu0 %1925
        %v1927 = vadd.f32 %v1885, %v1886
        %1928 = vadd.xlane.f32.xlu0 %v1927
        %v1929 = vpop.xlane.xlu0 %1928
        %v1930 = vadd.f32 %v1887, %v1888
        %1931 = vadd.xlane.f32.xlu0 %v1930
        %v1932 = vpop.xlane.xlu0 %1931
        %v1933 = vadd.f32 %v1889, %v1890
        %1934 = vadd.xlane.f32.xlu0 %v1933
        %v1935 = vpop.xlane.xlu0 %1934
        %v1936 = vadd.f32 %v1891, %v1892
        %1937 = vadd.xlane.f32.xlu0 %v1936
        %v1938 = vpop.xlane.xlu0 %1937
        %v1939 = vadd.f32 %v1893, %v1894
        %1940 = vadd.xlane.f32.xlu0 %v1939
        %v1941 = vpop.xlane.xlu0 %1940
        %v1942 = vadd.f32 %v1895, %v1896
        %1943 = vadd.xlane.f32.xlu0 %v1942
        %v1944 = vpop.xlane.xlu0 %1943
        %v1945 = vadd.f32 %v1849, %v1899
        %v1946 = vadd.f32 %v1850, %v1902
        %v1947 = vadd.f32 %v1851, %v1905
        %v1948 = vadd.f32 %v1852, %v1908
        %v1949 = vadd.f32 %v1853, %v1911
        %v1950 = vadd.f32 %v1854, %v1914
        %v1951 = vadd.f32 %v1855, %v1917
        %v1952 = vadd.f32 %v1856, %v1920
        %v1953 = vadd.f32 %v1857, %v1923
        %v1954 = vadd.f32 %v1858, %v1926
        %v1955 = vadd.f32 %v1859, %v1929
        %v1956 = vadd.f32 %v1860, %v1932
        %v1957 = vadd.f32 %v1861, %v1935
        %v1958 = vadd.f32 %v1862, %v1938
        %v1959 = vadd.f32 %v1863, %v1941
        %v1960 = vadd.f32 %v1864, %v1944
        %1961 = vst.msk [vmem:[#allocation5] sm:$0xff] %vm1832, %v1945
        %1962 = vst.msk [vmem:[#allocation5 + $0x8] sm:$0xff] %vm1832, %v1946
        %1963 = vst.msk [vmem:[#allocation5 + $0x10] sm:$0xff] %vm1832, %v1947
        %1964 = vst.msk [vmem:[#allocation5 + $0x18] sm:$0xff] %vm1832, %v1948
        %1965 = vst.msk [vmem:[#allocation5 + $0x20] sm:$0xff] %vm1832, %v1949
        %1966 = vst.msk [vmem:[#allocation5 + $0x28] sm:$0xff] %vm1832, %v1950
        %1967 = vst.msk [vmem:[#allocation5 + $0x30] sm:$0xff] %vm1832, %v1951
        %1968 = vst.msk [vmem:[#allocation5 + $0x38] sm:$0xff] %vm1832, %v1952
        %1969 = vst.msk [vmem:[#allocation5 + $0x40] sm:$0xff] %vm1832, %v1953
        %1970 = vst.msk [vmem:[#allocation5 + $0x48] sm:$0xff] %vm1832, %v1954
        %1971 = vst.msk [vmem:[#allocation5 + $0x50] sm:$0xff] %vm1832, %v1955
        %1972 = vst.msk [vmem:[#allocation5 + $0x58] sm:$0xff] %vm1832, %v1956
        %1973 = vst.msk [vmem:[#allocation5 + $0x60] sm:$0xff] %vm1832, %v1957
        %1974 = vst.msk [vmem:[#allocation5 + $0x68] sm:$0xff] %vm1832, %v1958
        %1975 = vst.msk [vmem:[#allocation5 + $0x70] sm:$0xff] %vm1832, %v1959
        %1976 = vst.msk [vmem:[#allocation5 + $0x78] sm:$0xff] %vm1832, %v1960
      $region48: #{supervised_contrastive_loss.3} parent=35 // pred_fallthru
        _
      %p1977 = pnand %p1197, %p505
      %p1978 = pneg %p1977
      // Predicated region
      $region49: #{supervised_contrastive_loss.3} parent=35 // pred_check
        _
      $region50: #{supervised_contrastive_loss.3} parent=35 // pred_check_branch
        %1980 = sbr.rel (%p1977) target = $region52
      $region51: #{supervised_contrastive_loss.3} parent=35 // pred_region
        %v1981 = vld [vmem:[#allocation4] sm:$0xff]
        %v1982 = vld [vmem:[#allocation4 + $0x8] sm:$0xff]
        %v1983 = vld [vmem:[#allocation4 + $0x10] sm:$0xff]
        %v1984 = vld [vmem:[#allocation4 + $0x18] sm:$0xff]
        %v1985 = vld [vmem:[#allocation4 + $0x20] sm:$0xff]
        %v1986 = vld [vmem:[#allocation4 + $0x28] sm:$0xff]
        %v1987 = vld [vmem:[#allocation4 + $0x30] sm:$0xff]
        %v1988 = vld [vmem:[#allocation4 + $0x38] sm:$0xff]
        %v1989 = vld [vmem:[#allocation4 + $0x40] sm:$0xff]
        %v1990 = vld [vmem:[#allocation4 + $0x48] sm:$0xff]
        %v1991 = vld [vmem:[#allocation4 + $0x50] sm:$0xff]
        %v1992 = vld [vmem:[#allocation4 + $0x58] sm:$0xff]
        %v1993 = vld [vmem:[#allocation4 + $0x60] sm:$0xff]
        %v1994 = vld [vmem:[#allocation4 + $0x68] sm:$0xff]
        %v1995 = vld [vmem:[#allocation4 + $0x70] sm:$0xff]
        %v1996 = vld [vmem:[#allocation4 + $0x78] sm:$0xff]
        %vm1997 = vcmask 7168
        %1998 = vst.msk [vmem:[%s330] sm:$0xff] %vm1997, %v1981
        %1999 = vst.msk [vmem:[%s330 + $0x8] sm:$0xff] %vm1997, %v1982
        %2000 = vst.msk [vmem:[%s330 + $0x10] sm:$0xff] %vm1997, %v1983
        %2001 = vst.msk [vmem:[%s330 + $0x18] sm:$0xff] %vm1997, %v1984
        %2002 = vst.msk [vmem:[%s330 + $0x20] sm:$0xff] %vm1997, %v1985
        %2003 = vst.msk [vmem:[%s330 + $0x28] sm:$0xff] %vm1997, %v1986
        %2004 = vst.msk [vmem:[%s330 + $0x30] sm:$0xff] %vm1997, %v1987
        %2005 = vst.msk [vmem:[%s330 + $0x38] sm:$0xff] %vm1997, %v1988
        %2006 = vst.msk [vmem:[%s330 + $0x40] sm:$0xff] %vm1997, %v1989
        %2007 = vst.msk [vmem:[%s330 + $0x48] sm:$0xff] %vm1997, %v1990
        %2008 = vst.msk [vmem:[%s330 + $0x50] sm:$0xff] %vm1997, %v1991
        %2009 = vst.msk [vmem:[%s330 + $0x58] sm:$0xff] %vm1997, %v1992
        %2010 = vst.msk [vmem:[%s330 + $0x60] sm:$0xff] %vm1997, %v1993
        %2011 = vst.msk [vmem:[%s330 + $0x68] sm:$0xff] %vm1997, %v1994
        %2012 = vst.msk [vmem:[%s330 + $0x70] sm:$0xff] %vm1997, %v1995
        %2013 = vst.msk [vmem:[%s330 + $0x78] sm:$0xff] %vm1997, %v1996
        %v2014 = vld [vmem:[#allocation5] sm:$0xff]
        %v2015 = vld [vmem:[#allocation5 + $0x8] sm:$0xff]
        %v2016 = vld [vmem:[#allocation5 + $0x10] sm:$0xff]
        %v2017 = vld [vmem:[#allocation5 + $0x18] sm:$0xff]
        %v2018 = vld [vmem:[#allocation5 + $0x20] sm:$0xff]
        %v2019 = vld [vmem:[#allocation5 + $0x28] sm:$0xff]
        %v2020 = vld [vmem:[#allocation5 + $0x30] sm:$0xff]
        %v2021 = vld [vmem:[#allocation5 + $0x38] sm:$0xff]
        %v2022 = vld [vmem:[#allocation5 + $0x40] sm:$0xff]
        %v2023 = vld [vmem:[#allocation5 + $0x48] sm:$0xff]
        %v2024 = vld [vmem:[#allocation5 + $0x50] sm:$0xff]
        %v2025 = vld [vmem:[#allocation5 + $0x58] sm:$0xff]
        %v2026 = vld [vmem:[#allocation5 + $0x60] sm:$0xff]
        %v2027 = vld [vmem:[#allocation5 + $0x68] sm:$0xff]
        %v2028 = vld [vmem:[#allocation5 + $0x70] sm:$0xff]
        %v2029 = vld [vmem:[#allocation5 + $0x78] sm:$0xff]
        %2030 = vst.msk [vmem:[%s336] sm:$0xff] %vm1997, %v2014
        %2031 = vst.msk [vmem:[%s336 + $0x8] sm:$0xff] %vm1997, %v2015
        %2032 = vst.msk [vmem:[%s336 + $0x10] sm:$0xff] %vm1997, %v2016
        %2033 = vst.msk [vmem:[%s336 + $0x18] sm:$0xff] %vm1997, %v2017
        %2034 = vst.msk [vmem:[%s336 + $0x20] sm:$0xff] %vm1997, %v2018
        %2035 = vst.msk [vmem:[%s336 + $0x28] sm:$0xff] %vm1997, %v2019
        %2036 = vst.msk [vmem:[%s336 + $0x30] sm:$0xff] %vm1997, %v2020
        %2037 = vst.msk [vmem:[%s336 + $0x38] sm:$0xff] %vm1997, %v2021
        %2038 = vst.msk [vmem:[%s336 + $0x40] sm:$0xff] %vm1997, %v2022
        %2039 = vst.msk [vmem:[%s336 + $0x48] sm:$0xff] %vm1997, %v2023
        %2040 = vst.msk [vmem:[%s336 + $0x50] sm:$0xff] %vm1997, %v2024
        %2041 = vst.msk [vmem:[%s336 + $0x58] sm:$0xff] %vm1997, %v2025
        %2042 = vst.msk [vmem:[%s336 + $0x60] sm:$0xff] %vm1997, %v2026
        %2043 = vst.msk [vmem:[%s336 + $0x68] sm:$0xff] %vm1997, %v2027
        %2044 = vst.msk [vmem:[%s336 + $0x70] sm:$0xff] %vm1997, %v2028
        %2045 = vst.msk [vmem:[%s336 + $0x78] sm:$0xff] %vm1997, %v2029
      $region52: #{supervised_contrastive_loss.3} parent=35 // pred_fallthru
        _
      %s2046 = smul.u32 16, %s22
      %p2047 = scmp.lt.s32.totalorder %s2046, 31
      %s2048 = scalar_select %p2047, %s2046, 31
      %s2049 = smul.addr %s2048, 8
      %s2050 = scalar_lea.vmem %s4, %s2049
      %s2051 = smul.u32 16, %s22
      %p2052 = scmp.lt.s32.totalorder %s2051, 31
      %s2053 = scalar_select %p2052, %s2051, 31
      %s2054 = smul.addr %s2053, 8
      %s2055 = scalar_lea.vmem %s5, %s2054
      // Predicated region
      $region53: #{supervised_contrastive_loss.3} parent=35 // pred_check
        %p2056 = pneg %p162
      $region54: #{supervised_contrastive_loss.3} parent=35 // pred_check_branch
        %2058 = sbr.rel (%p2056) target = $region56
      $region55: #{supervised_contrastive_loss.3} parent=35 // pred_region
        %s2059 = smul.u32 16, %s22
      $region56: #{supervised_contrastive_loss.3} parent=35 // pred_fallthru
        _
      // Predicated region
      $region57: #{supervised_contrastive_loss.3} parent=35 // pred_check
        %p2060 = pneg %p188
      $region58: #{supervised_contrastive_loss.3} parent=35 // pred_check_branch
        %2062 = sbr.rel (%p2060) target = $region60
      $region59: #{supervised_contrastive_loss.3} parent=35 // pred_region
        %s2063 = smul.u32 16, %s22
      $region60: #{supervised_contrastive_loss.3} parent=35 // pred_fallthru
        _
    $region36: #{supervised_contrastive_loss.3} parent=5 // pred_fallthru
      _
    %p2064 = scmp.le.s32.totalorder 2, %s12
    // Predicated region
    $region61: #{supervised_contrastive_loss.3} parent=5 // pred_check
      %p2065 = pneg %p2064
    $region62: #{supervised_contrastive_loss.3} parent=5 // pred_check_branch
      %2067 = sbr.rel (%p2065) target = $region64
    $region63: #{supervised_contrastive_loss.3} parent=5 // pred_region
      %s2068 = ssub.s32 %s12, 2
      // Predicated region
      $region65: #{supervised_contrastive_loss.3} parent=63 // pred_check
        %p2069 = pneg %p168
      $region66: #{supervised_contrastive_loss.3} parent=63 // pred_check_branch
        %2071 = sbr.rel (%p2069) target = $region68
      $region67: #{supervised_contrastive_loss.3} parent=63 // pred_region
        %s2072 = smul.u32 16, %s25
        %p2073 = scmp.lt.s32.totalorder %s2072, 31
        %s2074 = scalar_select %p2073, %s2072, 31
        %s2075 = smul.addr %s2074, 8
        %s2076 = scalar_lea.vmem %s4, %s2075
      $region68: #{supervised_contrastive_loss.3} parent=63 // pred_fallthru
        _
      // Predicated region
      $region69: #{supervised_contrastive_loss.3} parent=63 // pred_check
        %p2077 = pneg %p194
      $region70: #{supervised_contrastive_loss.3} parent=63 // pred_check_branch
        %2079 = sbr.rel (%p2077) target = $region72
      $region71: #{supervised_contrastive_loss.3} parent=63 // pred_region
        %s2080 = smul.u32 16, %s25
        %p2081 = scmp.lt.s32.totalorder %s2080, 31
        %s2082 = scalar_select %p2081, %s2080, 31
        %s2083 = smul.addr %s2082, 8
        %s2084 = scalar_lea.vmem %s5, %s2083
      $region72: #{supervised_contrastive_loss.3} parent=63 // pred_fallthru
        _
    $region64: #{supervised_contrastive_loss.3} parent=5 // pred_fallthru
      _
  $region6: #{supervised_contrastive_loss.3} parent=0 // loop_footer
    %s16 = sadd.s32 1, %s12
  $region7: #{supervised_contrastive_loss.3} parent=0 // loop_footer_branch
    %11 = sbr.rel target = $region3
  $region8: #{supervised_contrastive_loss.3} parent=0 // loop_exit
    _

</llo_original>
